<compile_context>
chip_gen: v5e
topology: v5e:2x2
jax: 0.10.0
libtpu: 0.0.40
codegen_flags: <defaults>
</compile_context>

<pallas_src>
import functools

import jax
import jax.numpy as jnp
from jax.experimental import pallas as pl
from jax.experimental.pallas import tpu as pltpu


def _round_up(x, m):
    return ((x + m - 1) // m) * m


# ---------------------------------------------------------------------------
# Conv kernel: stride-1 space-to-depth tap accumulation (bias + ReLU fused)
# ---------------------------------------------------------------------------
def _conv_tap_kernel(x_ref, w_ref, b_ref, o_ref, *, taps, OH, Ws, scale):
    """x_ref: (1, R, Cs) space-to-depth rows (lane dim = s*s*C channels)
       w_ref: (T, Cs, OC) bf16 tap matrices
       b_ref: (1, OC) f32 bias
       o_ref: (1, OH*Ws, OC) bf16 output (full-width rows; cols >= OW are discarded
              by the wrapper).
    Accumulates sum_t(window_t @ w_t) in f32 on the MXU, adds bias, ReLU, stores bf16.
    """
    M = OH * Ws
    OC = o_ref.shape[-1]
    acc = jnp.zeros((M, OC), jnp.float32)
    for t, (qy, qx) in enumerate(taps):           # static, unrolled (T <= 4 here)
        start = qy * Ws + qx                      # contiguous row window per tap
        xs = x_ref[0, start:start + M, :]
        if scale is not None:                     # fused /255 preprocessing (layer 0)
            xs = (xs.astype(jnp.float32) * scale).astype(jnp.bfloat16)
        else:
            xs = xs.astype(jnp.bfloat16)
        acc = acc + jnp.dot(xs, w_ref[t], preferred_element_type=jnp.float32)
    acc = jnp.maximum(acc + b_ref[...], 0.0)      # bias + ReLU in f32
    o_ref[0] = acc.astype(o_ref.dtype)


def conv2d_relu(x, w_taps, b, kernel_size, stride, input_scale=None):
    """ReLU(Conv2d(x, stride, padding=0)) in NHWC, returning (N, OH, OW, OC) bf16."""
    N, H, W, C = x.shape
    k, s = kernel_size, stride
    OH = (H - k) // s + 1
    OW = (W - k) // s + 1
    kq = -(-k // s)                               # ceil(k / s) taps per spatial dim
    Hs, Ws = OH + kq - 1, OW + kq - 1
    Hn, Wn = Hs * s, Ws * s
    pad_h, pad_w = max(0, Hn - H), max(0, Wn - W)
    if pad_h or pad_w:                            # tiny edge pad only (zero weights
        x = jnp.pad(x, ((0, 0), (0, pad_h), (0, pad_w), (0, 0)))  # pair with the pad)
    x = x[:, :Hn, :Wn, :]

    Cs = s * s * C
    # space-to-depth by the stride (~1x data, NOT a KH*KW im2col blowup), spatial
    # flattened to rows so in-kernel tap windows are contiguous row ranges.
    x_s2d = (x.reshape(N, Hs, s, Ws, s, C)
               .transpose(0, 1, 3, 2, 4, 5)
               .reshape(N, Hs * Ws, Cs))
    extra = kq - 1                                # keep the last tap's window in-bounds
    if extra:
        x_s2d = jnp.pad(x_s2d, ((0, 0), (0, extra), (0, 0)))
    R = Hs * Ws + extra
    T = kq * kq
    OC = w_taps.shape[-1]
    Mrows = OH * Ws                               # full-width rows; cols >= OW sliced off
    taps = tuple((qy, qx) for qy in range(kq) for qx in range(kq))

    bytes_accessed = (N * R * Cs * x_s2d.dtype.itemsize
                      + T * Cs * OC * 2 + OC * 4 + N * Mrows * OC * 2)
    out = pl.pallas_call(
        functools.partial(_conv_tap_kernel, taps=taps, OH=OH, Ws=Ws, scale=input_scale),
        out_shape=jax.ShapeDtypeStruct((N, Mrows, OC), jnp.bfloat16),
        grid=(N,),                                # pipelined over batch images
        in_specs=[
            pl.BlockSpec((1, R, Cs), lambda n: (n, 0, 0)),
            pl.BlockSpec((T, Cs, OC), lambda n: (0, 0, 0)),   # resident across grid
            pl.BlockSpec((1, OC), lambda n: (0, 0)),
        ],
        out_specs=pl.BlockSpec((1, Mrows, OC), lambda n: (n, 0, 0)),
        compiler_params=pltpu.CompilerParams(dimension_semantics=("parallel",)),
        cost_estimate=pl.CostEstimate(flops=2 * N * Mrows * Cs * OC * T,
                                      transcendentals=0,
                                      bytes_accessed=int(bytes_accessed)),
    )(x_s2d, w_taps, b)
    return out.reshape(N, OH, Ws, OC)[:, :, :OW, :]


# ---------------------------------------------------------------------------
# Fused MLP kernel: whole FC stack in one pallas_call (activations stay on-chip)
# ---------------------------------------------------------------------------
def _mlp_kernel(x_ref, *refs, acts):
    o_ref = refs[-1]
    wb = refs[:-1]
    h = x_ref[...]
    for i, act in enumerate(acts):
        w = wb[2 * i][...]
        bias = wb[2 * i + 1][...]
        y = jnp.dot(h.astype(jnp.bfloat16), w, preferred_element_type=jnp.float32) + bias
        h = jnp.tanh(y) if act == "tanh" else y   # f32 epilogue
    o_ref[...] = h.astype(o_ref.dtype)


def fused_mlp(x, fc_params):
    """x: (B, D) bf16 flattened conv features; fc_params: list of (w bf16, b f32)."""
    B, D = x.shape
    TB = min(_round_up(B, 8), 128)
    Bp = _round_up(B, TB)
    if Bp != B:                                   # pad only the ragged batch edge
        x = jnp.pad(x, ((0, Bp - B), (0, 0)))
    L = len(fc_params)
    acts = ("tanh",) * (L - 1) + ("none",)        # ptu.build_mlp: tanh hidden, identity out
    out_dim = int(fc_params[-1][0].shape[1])

    operands = [x]
    in_specs = [pl.BlockSpec((TB, D), lambda i: (i, 0))]
    for (w, bias) in fc_params:
        operands += [w, bias]
        in_specs += [pl.BlockSpec(w.shape, lambda i: (0, 0)),
                     pl.BlockSpec(bias.shape, lambda i: (0, 0))]

    flops = 2 * Bp * sum(int(w.shape[0]) * int(w.shape[1]) for w, _ in fc_params)
    trans = Bp * sum(int(w.shape[1]) for w, _ in fc_params[:-1])
    bytes_accessed = (int(x.size) * x.dtype.itemsize
                      + sum(int(w.size) * 2 + int(bb.size) * 4 for w, bb in fc_params)
                      + Bp * out_dim * 4)
    out = pl.pallas_call(
        functools.partial(_mlp_kernel, acts=acts),
        out_shape=jax.ShapeDtypeStruct((Bp, out_dim), jnp.float32),
        grid=(Bp // TB,),
        in_specs=in_specs,
        out_specs=pl.BlockSpec((TB, out_dim), lambda i: (i, 0)),
        compiler_params=pltpu.CompilerParams(dimension_semantics=("parallel",)),
        cost_estimate=pl.CostEstimate(flops=flops, transcendentals=trans,
                                      bytes_accessed=int(bytes_accessed)),
    )(*operands)
    return out[:B]


# ---------------------------------------------------------------------------
# Parameter init (torch-like uniform(-1/sqrt(fan_in), +1/sqrt(fan_in))),
# with all weight preprocessing (tap remap, transposes, permutation, bf16) hoisted here.
# ---------------------------------------------------------------------------
def _remap_conv_weight_to_taps(w_oihw, stride):
    """(OC, C, KH, KW) torch conv weight -> (Kq*Kq, s*s*C, OC) stride-1 tap matrices."""
    oc, c, kh, kw = w_oihw.shape
    s = stride
    kq_h = -(-kh // s)
    kq_w = -(-kw // s)
    cs = s * s * c
    taps = jnp.zeros((kq_h * kq_w, cs, oc), jnp.float32)
    for ky in range(kh):
        for kx in range(kw):
            qy, ry = divmod(ky, s)
            qx, rx = divmod(kx, s)
            t = qy * kq_w + qx
            base = (ry * s + rx) * c
            taps = taps.at[t, base:base + c, :].set(jnp.transpose(w_oihw[:, :, ky, kx]))
    return taps


def init_params(key, obs_shape, ac_dim, conv_channels, conv_kernel_sizes,
                conv_strides, n_fc_layers, fc_layer_size):
    params = {"conv": [], "fc": []}
    raw = {"conv": [], "fc": []}                  # f32 torch-layout copies for validation
    in_c, hh, ww = obs_shape
    for oc, k, s in zip(conv_channels, conv_kernel_sizes, conv_strides):
        key, kw_, kb_ = jax.random.split(key, 3)
        fan_in = in_c * k * k
        bound = 1.0 / (fan_in ** 0.5)
        w_oihw = jax.random.uniform(kw_, (oc, in_c, k, k), jnp.float32, -bound, bound)
        bias = jax.random.uniform(kb_, (oc,), jnp.float32, -bound, bound)
        raw["conv"].append((w_oihw, bias, s))
        w_taps = _remap_conv_weight_to_taps(w_oihw, s).astype(jnp.bfloat16)
        params["conv"].append((w_taps, bias.reshape(1, oc).astype(jnp.float32)))
        in_c = oc
        hh = (hh - k) // s + 1
        ww = (ww - k) // s + 1

    # TODO(synk): torch hardcodes conv_output_dim=3136 (84x84 Nature CNN); derived here
    # from the actual conv output so the small demo shapes are consistent.
    conv_output_dim = in_c * hh * ww
    dims = [conv_output_dim] + [fc_layer_size] * n_fc_layers + [ac_dim]
    for li in range(len(dims) - 1):
        din, dout = dims[li], dims[li + 1]
        key, kw_, kb_ = jax.random.split(key, 3)
        bound = 1.0 / (din ** 0.5)
        wfc = jax.random.uniform(kw_, (din, dout), jnp.float32, -bound, bound)
        bfc = jax.random.uniform(kb_, (dout,), jnp.float32, -bound, bound)
        raw["fc"].append((wfc, bfc))
        if li == 0:
            # Permute rows once: torch flattens NCHW (c, h, w); our conv stack flattens
            # NHWC (h, w, c).  Done at init so the forward pass needs no transpose.
            wfc = wfc.reshape(in_c, hh, ww, dout).transpose(1, 2, 0, 3).reshape(din, dout)
        params["fc"].append((wfc.astype(jnp.bfloat16),
                             bfc.reshape(1, dout).astype(jnp.float32)))

    params["std_param"] = jnp.zeros((ac_dim,), jnp.float32)   # nn.Parameter(zeros(ac_dim))
    raw["std_param"] = params["std_param"]
    return params, raw


# ---------------------------------------------------------------------------
# CNNPolicy forward
# ---------------------------------------------------------------------------
def cnn_policy_forward(obs, params, conv_geom):
    """obs: (B, C, H, W) float32.  conv_geom: static ((kernel, stride), ...).
    Returns (mean, std) of the action Normal (make_multi_normal parameters)."""
    # TODO(synk): PreprocessCarRacing is not defined in the provided snippet;
    # approximated as pixel scaling obs/255, fused into the first conv kernel below.
    x = jnp.transpose(obs, (0, 2, 3, 1))          # NCHW -> NHWC once; stay NHWC after
    for li, ((w_taps, bias), (k, s)) in enumerate(zip(params["conv"], conv_geom)):
        x = conv2d_relu(x, w_taps, bias, k, s,
                        input_scale=(1.0 / 255.0) if li == 0 else None)
    B = x.shape[0]
    flat = x.reshape(B, -1)                       # NHWC flatten (fc1 weight pre-permuted)
    mean = fused_mlp(flat, params["fc"])
    std = jax.nn.softplus(params["std_param"]) + 0.01
    # TODO(synk): torch returns a distributions.Normal; we return its parameters.
    return mean, std


# ---------------------------------------------------------------------------
# Pure-JAX f32 reference (NCHW, torch semantics) for validation
# ---------------------------------------------------------------------------
def reference_forward(obs, raw):
    x = obs.astype(jnp.float32) / 255.0
    for (w_oihw, bias, s) in raw["conv"]:
        x = jax.lax.conv_general_dilated(x, w_oihw, (s, s), "VALID",
                                         dimension_numbers=("NCHW", "OIHW", "NCHW"))
        x = jnp.maximum(x + bias.reshape(1, -1, 1, 1), 0.0)
    h = x.reshape(x.shape[0], -1)                 # torch NCHW flatten order
    fcs = raw["fc"]
    for i, (w, bias) in enumerate(fcs):
        h = h @ w + bias
        if i < len(fcs) - 1:
            h = jnp.tanh(h)
    std = jax.nn.softplus(raw["std_param"]) + 0.01
    return h, std


if __name__ == "__main__":
    B = 2
    obs_shape = (4, 16, 16)          # (C, H, W) — small demo shapes
    ac_dim = 3
    conv_channels = [8, 16]
    conv_kernel_sizes = [3, 3]
    conv_strides = [2, 2]
    n_fc_layers = 2
    fc_layer_size = 32

    root = jax.random.PRNGKey(0)
    k_params, k_obs = jax.random.split(root)
    params, raw = init_params(k_params, obs_shape, ac_dim, conv_channels,
                              conv_kernel_sizes, conv_strides, n_fc_layers,
                              fc_layer_size)
    conv_geom = tuple(zip(conv_kernel_sizes, conv_strides))
    obs = jax.random.uniform(k_obs, (B,) + obs_shape, jnp.float32, 0.0, 255.0)

    fwd = jax.jit(cnn_policy_forward, static_argnums=2)
    mean, std = fwd(obs, params, conv_geom)
    jax.block_until_ready((mean, std))

    assert mean.shape == (B, ac_dim) and std.shape == (ac_dim,)
    mean_ref, std_ref = reference_forward(obs, raw)
    err = float(jnp.max(jnp.abs(mean - mean_ref)))
    assert err < 5e-2, f"kernel vs reference mismatch: {err}"
    assert float(jnp.max(jnp.abs(std - std_ref))) < 1e-5
    assert bool(jnp.all(jnp.isfinite(mean))) and bool(jnp.all(std > 0))
    print("KERNEL_OK")
</pallas_src>

<mosaic_0001>
module attributes {stable_mosaic.version = 11 : i64} {
  func.func @_conv_tap_kernel(%arg0: i32, %arg1: memref<1x65x16xf32, #tpu.memory_space<vmem>>, %arg2: memref<4x16x8xbf16, #tpu.memory_space<vmem>>, %arg3: memref<1x8xf32, #tpu.memory_space<vmem>>, %arg4: memref<1x56x8xbf16, #tpu.memory_space<vmem>>) attributes {dimension_semantics = [#tpu.dimension_semantics<parallel>], iteration_bounds = array<i64: 2>, scalar_prefetch = 0 : i64, scratch_operands = 0 : i64, tpu.core_type = #tpu.core_type<tc>, window_params = [{transform_indices = @transform_0, window_bounds = array<i64: 1, 65, 16>}, {pipeline_mode = #tpu.pipeline_mode<synchronous>, transform_indices = @transform_1, window_bounds = array<i64: 4, 16, 8>}, {pipeline_mode = #tpu.pipeline_mode<synchronous>, transform_indices = @transform_2, window_bounds = array<i64: 1, 8>}, {transform_indices = @transform_3, window_bounds = array<i64: 1, 56, 8>}]} {
    %cst = arith.constant 0.000000e+00 : f32
    %0 = vector.broadcast %cst : f32 to vector<56x8xf32>
    %c0 = arith.constant 0 : index
    %c0_0 = arith.constant 0 : index
    %c0_1 = arith.constant 0 : index
    %1 = vector.load %arg1[%c0, %c0_0, %c0_1] : memref<1x65x16xf32, #tpu.memory_space<vmem>>, vector<1x56x16xf32>
    %2 = vector.shape_cast %1 : vector<1x56x16xf32> to vector<56x16xf32>
    %cst_2 = arith.constant 0.00392156886 : f32
    %3 = vector.broadcast %cst_2 : f32 to vector<56x16xf32>
    %4 = arith.mulf %2, %3 : vector<56x16xf32>
    %5 = arith.truncf %4 : vector<56x16xf32> to vector<56x16xbf16>
    %c0_3 = arith.constant 0 : index
    %c0_4 = arith.constant 0 : index
    %c0_5 = arith.constant 0 : index
    %6 = vector.load %arg2[%c0_3, %c0_4, %c0_5] : memref<4x16x8xbf16, #tpu.memory_space<vmem>>, vector<1x16x8xbf16>
    %7 = vector.shape_cast %6 : vector<1x16x8xbf16> to vector<16x8xbf16>
    %cst_6 = arith.constant dense<0.000000e+00> : vector<56x8xf32>
    %8 = tpu.matmul %5, %7, %cst_6 {dimension_numbers = #tpu.dot_dimension_numbers<[1], [0], [0], [1], [0, 0, 1, 1], [], []>} : vector<56x16xbf16>, vector<16x8xbf16>, vector<56x8xf32> -> vector<56x8xf32>
    %9 = arith.addf %0, %8 : vector<56x8xf32>
    %c0_7 = arith.constant 0 : index
    %c1 = arith.constant 1 : index
    %c0_8 = arith.constant 0 : index
    %10 = vector.load %arg1[%c0_7, %c1, %c0_8] : memref<1x65x16xf32, #tpu.memory_space<vmem>>, vector<1x56x16xf32>
    %11 = vector.shape_cast %10 : vector<1x56x16xf32> to vector<56x16xf32>
    %cst_9 = arith.constant 0.00392156886 : f32
    %12 = vector.broadcast %cst_9 : f32 to vector<56x16xf32>
    %13 = arith.mulf %11, %12 : vector<56x16xf32>
    %14 = arith.truncf %13 : vector<56x16xf32> to vector<56x16xbf16>
    %c1_10 = arith.constant 1 : index
    %c0_11 = arith.constant 0 : index
    %c0_12 = arith.constant 0 : index
    %15 = vector.load %arg2[%c1_10, %c0_11, %c0_12] : memref<4x16x8xbf16, #tpu.memory_space<vmem>>, vector<1x16x8xbf16>
    %16 = vector.shape_cast %15 : vector<1x16x8xbf16> to vector<16x8xbf16>
    %cst_13 = arith.constant dense<0.000000e+00> : vector<56x8xf32>
    %17 = tpu.matmul %14, %16, %cst_13 {dimension_numbers = #tpu.dot_dimension_numbers<[1], [0], [0], [1], [0, 0, 1, 1], [], []>} : vector<56x16xbf16>, vector<16x8xbf16>, vector<56x8xf32> -> vector<56x8xf32>
    %18 = arith.addf %9, %17 : vector<56x8xf32>
    %c0_14 = arith.constant 0 : index
    %c8 = arith.constant 8 : index
    %c0_15 = arith.constant 0 : index
    %19 = vector.load %arg1[%c0_14, %c8, %c0_15] : memref<1x65x16xf32, #tpu.memory_space<vmem>>, vector<1x56x16xf32>
    %20 = vector.shape_cast %19 : vector<1x56x16xf32> to vector<56x16xf32>
    %cst_16 = arith.constant 0.00392156886 : f32
    %21 = vector.broadcast %cst_16 : f32 to vector<56x16xf32>
    %22 = arith.mulf %20, %21 : vector<56x16xf32>
    %23 = arith.truncf %22 : vector<56x16xf32> to vector<56x16xbf16>
    %c2 = arith.constant 2 : index
    %c0_17 = arith.constant 0 : index
    %c0_18 = arith.constant 0 : index
    %24 = vector.load %arg2[%c2, %c0_17, %c0_18] : memref<4x16x8xbf16, #tpu.memory_space<vmem>>, vector<1x16x8xbf16>
    %25 = vector.shape_cast %24 : vector<1x16x8xbf16> to vector<16x8xbf16>
    %cst_19 = arith.constant dense<0.000000e+00> : vector<56x8xf32>
    %26 = tpu.matmul %23, %25, %cst_19 {dimension_numbers = #tpu.dot_dimension_numbers<[1], [0], [0], [1], [0, 0, 1, 1], [], []>} : vector<56x16xbf16>, vector<16x8xbf16>, vector<56x8xf32> -> vector<56x8xf32>
    %27 = arith.addf %18, %26 : vector<56x8xf32>
    %c0_20 = arith.constant 0 : index
    %c9 = arith.constant 9 : index
    %c0_21 = arith.constant 0 : index
    %28 = vector.load %arg1[%c0_20, %c9, %c0_21] : memref<1x65x16xf32, #tpu.memory_space<vmem>>, vector<1x56x16xf32>
    %29 = vector.shape_cast %28 : vector<1x56x16xf32> to vector<56x16xf32>
    %cst_22 = arith.constant 0.00392156886 : f32
    %30 = vector.broadcast %cst_22 : f32 to vector<56x16xf32>
    %31 = arith.mulf %29, %30 : vector<56x16xf32>
    %32 = arith.truncf %31 : vector<56x16xf32> to vector<56x16xbf16>
    %c3 = arith.constant 3 : index
    %c0_23 = arith.constant 0 : index
    %c0_24 = arith.constant 0 : index
    %33 = vector.load %arg2[%c3, %c0_23, %c0_24] : memref<4x16x8xbf16, #tpu.memory_space<vmem>>, vector<1x16x8xbf16>
    %34 = vector.shape_cast %33 : vector<1x16x8xbf16> to vector<16x8xbf16>
    %cst_25 = arith.constant dense<0.000000e+00> : vector<56x8xf32>
    %35 = tpu.matmul %32, %34, %cst_25 {dimension_numbers = #tpu.dot_dimension_numbers<[1], [0], [0], [1], [0, 0, 1, 1], [], []>} : vector<56x16xbf16>, vector<16x8xbf16>, vector<56x8xf32> -> vector<56x8xf32>
    %36 = arith.addf %27, %35 : vector<56x8xf32>
    %c0_26 = arith.constant 0 : index
    %c0_27 = arith.constant 0 : index
    %37 = vector.load %arg3[%c0_26, %c0_27] : memref<1x8xf32, #tpu.memory_space<vmem>>, vector<1x8xf32>
    %38 = vector.broadcast %37 : vector<1x8xf32> to vector<56x8xf32>
    %39 = arith.addf %36, %38 : vector<56x8xf32>
    %cst_28 = arith.constant 0.000000e+00 : f32
    %40 = vector.broadcast %cst_28 : f32 to vector<56x8xf32>
    %41 = arith.maximumf %39, %40 : vector<56x8xf32>
    %42 = arith.truncf %41 : vector<56x8xf32> to vector<56x8xbf16>
    %c0_29 = arith.constant 0 : index
    %c0_30 = arith.constant 0 : index
    %c0_31 = arith.constant 0 : index
    %43 = vector.load %arg4[%c0_29, %c0_30, %c0_31] : memref<1x56x8xbf16, #tpu.memory_space<vmem>>, vector<1x56x8xbf16>
    %44 = vector.shape_cast %43 : vector<1x56x8xbf16> to vector<56x8xbf16>
    %45 = vector.shape_cast %42 : vector<56x8xbf16> to vector<1x56x8xbf16>
    tpu.vector_store %arg4[%c0_29, %c0_30, %c0_31], %45 {strides = array<i32>} : memref<1x56x8xbf16, #tpu.memory_space<vmem>>, vector<1x56x8xbf16>,
    return
  }
  func.func @transform_0(%arg0: i32) -> (i32, i32, i32) {
    %c0_i32 = arith.constant 0 : i32
    %c0_i32_0 = arith.constant 0 : i32
    %c0_i32_1 = arith.constant 0 : i32
    return %arg0, %c0_i32, %c0_i32_0 : i32, i32, i32
  }
  func.func @transform_1(%arg0: i32) -> (i32, i32, i32) {
    %c0_i32 = arith.constant 0 : i32
    %c0_i32_0 = arith.constant 0 : i32
    %c0_i32_1 = arith.constant 0 : i32
    %c0_i32_2 = arith.constant 0 : i32
    return %c0_i32, %c0_i32_0, %c0_i32_1 : i32, i32, i32
  }
  func.func @transform_2(%arg0: i32) -> (i32, i32) {
    %c0_i32 = arith.constant 0 : i32
    %c0_i32_0 = arith.constant 0 : i32
    %c0_i32_1 = arith.constant 0 : i32
    return %c0_i32, %c0_i32_0 : i32, i32
  }
  func.func @transform_3(%arg0: i32) -> (i32, i32, i32) {
    %c0_i32 = arith.constant 0 : i32
    %c0_i32_0 = arith.constant 0 : i32
    %c0_i32_1 = arith.constant 0 : i32
    return %arg0, %c0_i32, %c0_i32_0 : i32, i32, i32
  }
}

module attributes {stable_mosaic.version = 11 : i64} {
  func.func @_conv_tap_kernel(%arg0: i32, %arg1: memref<1x17x32xbf16, #tpu.memory_space<vmem>>, %arg2: memref<4x32x16xbf16, #tpu.memory_space<vmem>>, %arg3: memref<1x16xf32, #tpu.memory_space<vmem>>, %arg4: memref<1x12x16xbf16, #tpu.memory_space<vmem>>) attributes {dimension_semantics = [#tpu.dimension_semantics<parallel>], iteration_bounds = array<i64: 2>, scalar_prefetch = 0 : i64, scratch_operands = 0 : i64, tpu.core_type = #tpu.core_type<tc>, window_params = [{transform_indices = @transform_0, window_bounds = array<i64: 1, 17, 32>}, {pipeline_mode = #tpu.pipeline_mode<synchronous>, transform_indices = @transform_1, window_bounds = array<i64: 4, 32, 16>}, {pipeline_mode = #tpu.pipeline_mode<synchronous>, transform_indices = @transform_2, window_bounds = array<i64: 1, 16>}, {transform_indices = @transform_3, window_bounds = array<i64: 1, 12, 16>}]} {
    %cst = arith.constant 0.000000e+00 : f32
    %0 = vector.broadcast %cst : f32 to vector<12x16xf32>
    %c0 = arith.constant 0 : index
    %c0_0 = arith.constant 0 : index
    %c0_1 = arith.constant 0 : index
    %1 = vector.load %arg1[%c0, %c0_0, %c0_1] : memref<1x17x32xbf16, #tpu.memory_space<vmem>>, vector<1x12x32xbf16>
    %2 = vector.shape_cast %1 : vector<1x12x32xbf16> to vector<12x32xbf16>
    %c0_2 = arith.constant 0 : index
    %c0_3 = arith.constant 0 : index
    %c0_4 = arith.constant 0 : index
    %3 = vector.load %arg2[%c0_2, %c0_3, %c0_4] : memref<4x32x16xbf16, #tpu.memory_space<vmem>>, vector<1x32x16xbf16>
    %4 = vector.shape_cast %3 : vector<1x32x16xbf16> to vector<32x16xbf16>
    %cst_5 = arith.constant dense<0.000000e+00> : vector<12x16xf32>
    %5 = tpu.matmul %2, %4, %cst_5 {dimension_numbers = #tpu.dot_dimension_numbers<[1], [0], [0], [1], [0, 0, 1, 1], [], []>} : vector<12x32xbf16>, vector<32x16xbf16>, vector<12x16xf32> -> vector<12x16xf32>
    %6 = arith.addf %0, %5 : vector<12x16xf32>
    %c0_6 = arith.constant 0 : index
    %c1 = arith.constant 1 : index
    %c0_7 = arith.constant 0 : index
    %7 = vector.load %arg1[%c0_6, %c1, %c0_7] : memref<1x17x32xbf16, #tpu.memory_space<vmem>>, vector<1x12x32xbf16>
    %8 = vector.shape_cast %7 : vector<1x12x32xbf16> to vector<12x32xbf16>
    %c1_8 = arith.constant 1 : index
    %c0_9 = arith.constant 0 : index
    %c0_10 = arith.constant 0 : index
    %9 = vector.load %arg2[%c1_8, %c0_9, %c0_10] : memref<4x32x16xbf16, #tpu.memory_space<vmem>>, vector<1x32x16xbf16>
    %10 = vector.shape_cast %9 : vector<1x32x16xbf16> to vector<32x16xbf16>
    %cst_11 = arith.constant dense<0.000000e+00> : vector<12x16xf32>
    %11 = tpu.matmul %8, %10, %cst_11 {dimension_numbers = #tpu.dot_dimension_numbers<[1], [0], [0], [1], [0, 0, 1, 1], [], []>} : vector<12x32xbf16>, vector<32x16xbf16>, vector<12x16xf32> -> vector<12x16xf32>
    %12 = arith.addf %6, %11 : vector<12x16xf32>
    %c0_12 = arith.constant 0 : index
    %c4 = arith.constant 4 : index
    %c0_13 = arith.constant 0 : index
    %13 = vector.load %arg1[%c0_12, %c4, %c0_13] : memref<1x17x32xbf16, #tpu.memory_space<vmem>>, vector<1x12x32xbf16>
    %14 = vector.shape_cast %13 : vector<1x12x32xbf16> to vector<12x32xbf16>
    %c2 = arith.constant 2 : index
    %c0_14 = arith.constant 0 : index
    %c0_15 = arith.constant 0 : index
    %15 = vector.load %arg2[%c2, %c0_14, %c0_15] : memref<4x32x16xbf16, #tpu.memory_space<vmem>>, vector<1x32x16xbf16>
    %16 = vector.shape_cast %15 : vector<1x32x16xbf16> to vector<32x16xbf16>
    %cst_16 = arith.constant dense<0.000000e+00> : vector<12x16xf32>
    %17 = tpu.matmul %14, %16, %cst_16 {dimension_numbers = #tpu.dot_dimension_numbers<[1], [0], [0], [1], [0, 0, 1, 1], [], []>} : vector<12x32xbf16>, vector<32x16xbf16>, vector<12x16xf32> -> vector<12x16xf32>
    %18 = arith.addf %12, %17 : vector<12x16xf32>
    %c0_17 = arith.constant 0 : index
    %c5 = arith.constant 5 : index
    %c0_18 = arith.constant 0 : index
    %19 = vector.load %arg1[%c0_17, %c5, %c0_18] : memref<1x17x32xbf16, #tpu.memory_space<vmem>>, vector<1x12x32xbf16>
    %20 = vector.shape_cast %19 : vector<1x12x32xbf16> to vector<12x32xbf16>
    %c3 = arith.constant 3 : index
    %c0_19 = arith.constant 0 : index
    %c0_20 = arith.constant 0 : index
    %21 = vector.load %arg2[%c3, %c0_19, %c0_20] : memref<4x32x16xbf16, #tpu.memory_space<vmem>>, vector<1x32x16xbf16>
    %22 = vector.shape_cast %21 : vector<1x32x16xbf16> to vector<32x16xbf16>
    %cst_21 = arith.constant dense<0.000000e+00> : vector<12x16xf32>
    %23 = tpu.matmul %20, %22, %cst_21 {dimension_numbers = #tpu.dot_dimension_numbers<[1], [0], [0], [1], [0, 0, 1, 1], [], []>} : vector<12x32xbf16>, vector<32x16xbf16>, vector<12x16xf32> -> vector<12x16xf32>
    %24 = arith.addf %18, %23 : vector<12x16xf32>
    %c0_22 = arith.constant 0 : index
    %c0_23 = arith.constant 0 : index
    %25 = vector.load %arg3[%c0_22, %c0_23] : memref<1x16xf32, #tpu.memory_space<vmem>>, vector<1x16xf32>
    %26 = vector.broadcast %25 : vector<1x16xf32> to vector<12x16xf32>
    %27 = arith.addf %24, %26 : vector<12x16xf32>
    %cst_24 = arith.constant 0.000000e+00 : f32
    %28 = vector.broadcast %cst_24 : f32 to vector<12x16xf32>
    %29 = arith.maximumf %27, %28 : vector<12x16xf32>
    %30 = arith.truncf %29 : vector<12x16xf32> to vector<12x16xbf16>
    %c0_25 = arith.constant 0 : index
    %c0_26 = arith.constant 0 : index
    %c0_27 = arith.constant 0 : index
    %31 = vector.load %arg4[%c0_25, %c0_26, %c0_27] : memref<1x12x16xbf16, #tpu.memory_space<vmem>>, vector<1x12x16xbf16>
    %32 = vector.shape_cast %31 : vector<1x12x16xbf16> to vector<12x16xbf16>
    %33 = vector.shape_cast %30 : vector<12x16xbf16> to vector<1x12x16xbf16>
    tpu.vector_store %arg4[%c0_25, %c0_26, %c0_27], %33 {strides = array<i32>} : memref<1x12x16xbf16, #tpu.memory_space<vmem>>, vector<1x12x16xbf16>,
    return
  }
  func.func @transform_0(%arg0: i32) -> (i32, i32, i32) {
    %c0_i32 = arith.constant 0 : i32
    %c0_i32_0 = arith.constant 0 : i32
    %c0_i32_1 = arith.constant 0 : i32
    return %arg0, %c0_i32, %c0_i32_0 : i32, i32, i32
  }
  func.func @transform_1(%arg0: i32) -> (i32, i32, i32) {
    %c0_i32 = arith.constant 0 : i32
    %c0_i32_0 = arith.constant 0 : i32
    %c0_i32_1 = arith.constant 0 : i32
    %c0_i32_2 = arith.constant 0 : i32
    return %c0_i32, %c0_i32_0, %c0_i32_1 : i32, i32, i32
  }
  func.func @transform_2(%arg0: i32) -> (i32, i32) {
    %c0_i32 = arith.constant 0 : i32
    %c0_i32_0 = arith.constant 0 : i32
    %c0_i32_1 = arith.constant 0 : i32
    return %c0_i32, %c0_i32_0 : i32, i32
  }
  func.func @transform_3(%arg0: i32) -> (i32, i32, i32) {
    %c0_i32 = arith.constant 0 : i32
    %c0_i32_0 = arith.constant 0 : i32
    %c0_i32_1 = arith.constant 0 : i32
    return %arg0, %c0_i32, %c0_i32_0 : i32, i32, i32
  }
}

module attributes {stable_mosaic.version = 11 : i64} {
  func.func @_mlp_kernel(%arg0: i32, %arg1: memref<8x144xbf16, #tpu.memory_space<vmem>>, %arg2: memref<144x32xbf16, #tpu.memory_space<vmem>>, %arg3: memref<1x32xf32, #tpu.memory_space<vmem>>, %arg4: memref<32x32xbf16, #tpu.memory_space<vmem>>, %arg5: memref<1x32xf32, #tpu.memory_space<vmem>>, %arg6: memref<32x3xbf16, #tpu.memory_space<vmem>>, %arg7: memref<1x3xf32, #tpu.memory_space<vmem>>, %arg8: memref<8x3xf32, #tpu.memory_space<vmem>>) attributes {dimension_semantics = [#tpu.dimension_semantics<parallel>], iteration_bounds = array<i64: 1>, scalar_prefetch = 0 : i64, scratch_operands = 0 : i64, tpu.core_type = #tpu.core_type<tc>, window_params = [{transform_indices = @transform_0, window_bounds = array<i64: 8, 144>}, {pipeline_mode = #tpu.pipeline_mode<synchronous>, transform_indices = @transform_1, window_bounds = array<i64: 144, 32>}, {pipeline_mode = #tpu.pipeline_mode<synchronous>, transform_indices = @transform_2, window_bounds = array<i64: 1, 32>}, {pipeline_mode = #tpu.pipeline_mode<synchronous>, transform_indices = @transform_3, window_bounds = array<i64: 32, 32>}, {pipeline_mode = #tpu.pipeline_mode<synchronous>, transform_indices = @transform_4, window_bounds = array<i64: 1, 32>}, {pipeline_mode = #tpu.pipeline_mode<synchronous>, transform_indices = @transform_5, window_bounds = array<i64: 32, 3>}, {pipeline_mode = #tpu.pipeline_mode<synchronous>, transform_indices = @transform_6, window_bounds = array<i64: 1, 3>}, {transform_indices = @transform_7, window_bounds = array<i64: 8, 3>}]} {
    %c0 = arith.constant 0 : index
    %c0_0 = arith.constant 0 : index
    %0 = vector.load %arg1[%c0, %c0_0] : memref<8x144xbf16, #tpu.memory_space<vmem>>, vector<8x144xbf16>
    %c0_1 = arith.constant 0 : index
    %c0_2 = arith.constant 0 : index
    %1 = vector.load %arg2[%c0_1, %c0_2] : memref<144x32xbf16, #tpu.memory_space<vmem>>, vector<144x32xbf16>
    %c0_3 = arith.constant 0 : index
    %c0_4 = arith.constant 0 : index
    %2 = vector.load %arg3[%c0_3, %c0_4] : memref<1x32xf32, #tpu.memory_space<vmem>>, vector<1x32xf32>
    %cst = arith.constant dense<0.000000e+00> : vector<8x32xf32>
    %3 = tpu.matmul %0, %1, %cst {dimension_numbers = #tpu.dot_dimension_numbers<[1], [0], [0], [1], [0, 0, 1, 1], [], []>} : vector<8x144xbf16>, vector<144x32xbf16>, vector<8x32xf32> -> vector<8x32xf32>
    %4 = vector.broadcast %2 : vector<1x32xf32> to vector<8x32xf32>
    %5 = arith.addf %3, %4 : vector<8x32xf32>
    %6 = math.tanh %5 : vector<8x32xf32>
    %c0_5 = arith.constant 0 : index
    %c0_6 = arith.constant 0 : index
    %7 = vector.load %arg4[%c0_5, %c0_6] : memref<32x32xbf16, #tpu.memory_space<vmem>>, vector<32x32xbf16>
    %c0_7 = arith.constant 0 : index
    %c0_8 = arith.constant 0 : index
    %8 = vector.load %arg5[%c0_7, %c0_8] : memref<1x32xf32, #tpu.memory_space<vmem>>, vector<1x32xf32>
    %9 = arith.truncf %6 : vector<8x32xf32> to vector<8x32xbf16>
    %cst_9 = arith.constant dense<0.000000e+00> : vector<8x32xf32>
    %10 = tpu.matmul %9, %7, %cst_9 {dimension_numbers = #tpu.dot_dimension_numbers<[1], [0], [0], [1], [0, 0, 1, 1], [], []>} : vector<8x32xbf16>, vector<32x32xbf16>, vector<8x32xf32> -> vector<8x32xf32>
    %11 = vector.broadcast %8 : vector<1x32xf32> to vector<8x32xf32>
    %12 = arith.addf %10, %11 : vector<8x32xf32>
    %13 = math.tanh %12 : vector<8x32xf32>
    %c0_10 = arith.constant 0 : index
    %c0_11 = arith.constant 0 : index
    %14 = vector.load %arg6[%c0_10, %c0_11] : memref<32x3xbf16, #tpu.memory_space<vmem>>, vector<32x3xbf16>
    %c0_12 = arith.constant 0 : index
    %c0_13 = arith.constant 0 : index
    %15 = vector.load %arg7[%c0_12, %c0_13] : memref<1x3xf32, #tpu.memory_space<vmem>>, vector<1x3xf32>
    %16 = arith.truncf %13 : vector<8x32xf32> to vector<8x32xbf16>
    %cst_14 = arith.constant dense<0.000000e+00> : vector<8x3xf32>
    %17 = tpu.matmul %16, %14, %cst_14 {dimension_numbers = #tpu.dot_dimension_numbers<[1], [0], [0], [1], [0, 0, 1, 1], [], []>} : vector<8x32xbf16>, vector<32x3xbf16>, vector<8x3xf32> -> vector<8x3xf32>
    %18 = vector.broadcast %15 : vector<1x3xf32> to vector<8x3xf32>
    %19 = arith.addf %17, %18 : vector<8x3xf32>
    %c0_15 = arith.constant 0 : index
    %c0_16 = arith.constant 0 : index
    %20 = vector.load %arg8[%c0_15, %c0_16] : memref<8x3xf32, #tpu.memory_space<vmem>>, vector<8x3xf32>
    tpu.vector_store %arg8[%c0_15, %c0_16], %19 {strides = array<i32>} : memref<8x3xf32, #tpu.memory_space<vmem>>, vector<8x3xf32>,
    return
  }
  func.func @transform_0(%arg0: i32) -> (i32, i32) {
    %c0_i32 = arith.constant 0 : i32
    %c0_i32_0 = arith.constant 0 : i32
    return %arg0, %c0_i32 : i32, i32
  }
  func.func @transform_1(%arg0: i32) -> (i32, i32) {
    %c0_i32 = arith.constant 0 : i32
    %c0_i32_0 = arith.constant 0 : i32
    %c0_i32_1 = arith.constant 0 : i32
    return %c0_i32, %c0_i32_0 : i32, i32
  }
  func.func @transform_2(%arg0: i32) -> (i32, i32) {
    %c0_i32 = arith.constant 0 : i32
    %c0_i32_0 = arith.constant 0 : i32
    %c0_i32_1 = arith.constant 0 : i32
    return %c0_i32, %c0_i32_0 : i32, i32
  }
  func.func @transform_3(%arg0: i32) -> (i32, i32) {
    %c0_i32 = arith.constant 0 : i32
    %c0_i32_0 = arith.constant 0 : i32
    %c0_i32_1 = arith.constant 0 : i32
    return %c0_i32, %c0_i32_0 : i32, i32
  }
  func.func @transform_4(%arg0: i32) -> (i32, i32) {
    %c0_i32 = arith.constant 0 : i32
    %c0_i32_0 = arith.constant 0 : i32
    %c0_i32_1 = arith.constant 0 : i32
    return %c0_i32, %c0_i32_0 : i32, i32
  }
  func.func @transform_5(%arg0: i32) -> (i32, i32) {
    %c0_i32 = arith.constant 0 : i32
    %c0_i32_0 = arith.constant 0 : i32
    %c0_i32_1 = arith.constant 0 : i32
    return %c0_i32, %c0_i32_0 : i32, i32
  }
  func.func @transform_6(%arg0: i32) -> (i32, i32) {
    %c0_i32 = arith.constant 0 : i32
    %c0_i32_0 = arith.constant 0 : i32
    %c0_i32_1 = arith.constant 0 : i32
    return %c0_i32, %c0_i32_0 : i32, i32
  }
  func.func @transform_7(%arg0: i32) -> (i32, i32) {
    %c0_i32 = arith.constant 0 : i32
    %c0_i32_0 = arith.constant 0 : i32
    return %arg0, %c0_i32 : i32, i32
  }
}

</mosaic_0001>

<llo_original>
// kernel: cnn_policy_forward.3
$region0: #{cnn_policy_forward.3}
  #allocation0 [shape = 'u32[]', space=smem, size = 0x4, offset = 0x4, fixed_abs, tag = 'smem constant byte address 0x4 - core index']
  #allocation1 [shape = 'u32[72,128]{1,0:T(1,128)}', space=vmem, size = 0x9000, scoped, tag = 'internal scratch']
  %s0 = inlined_call_operand.vmem [shape: f32[2,65,16], index: 0, kind: input, shape index: {}]
  %s1 = inlined_call_operand.vmem [shape: bf16[4,16,8], index: 1, kind: input, shape index: {}]
  %s2 = inlined_call_operand.vmem [shape: f32[1,8], index: 2, kind: input, shape index: {}]
  %s3 = inlined_call_operand.vmem [shape: bf16[2,56,8], index: 3, kind: output, shape index: {}]
  %s4 = sld [smem:[#allocation0]]
  $region45: #{cnn_policy_forward.3} parent=0
    _
  %s6 = ssub.s32 1, %s4
  %s7 = scalar_select 0, %s6, %s4
  loop: start=0, step=1, limit=4
  $region2: #{cnn_policy_forward.3} parent=0 // loop_pre_header
    _
  $region3: #{cnn_policy_forward.3} parent=0 // loop_header
    %s9 = sphi 0, %s13
    %p10 = scmp.ge.s32.totalorder %s9, 4
    %s19 = sphi 0, %s21
    %s22 = sphi 0, %s19
    %s23 = sphi 0, %s22
    %s39 = sphi 0, %s23
    %s43 = sphi 0, %s43
    %s45 = sphi 0, %s43
    %s46 = sphi 0, %s45
    %s60 = sphi 0, %s46
    %s64 = sphi 0, %s64
    %s66 = sphi 0, %s64
    %s67 = sphi 0, %s66
    %s81 = sphi 0, %s67
    %s87 = sphi 0, %s89
    %s90 = sphi 0, %s87
    %s91 = sphi 0, %s90
    %s107 = sphi 0, %s91
  $region4: #{cnn_policy_forward.3} parent=0 // loop_header_branch
    %12 = sbr.rel (%p10) target = $region8
  $region5: #{cnn_policy_forward.3} parent=0 // loop_body
    %s14 = ssub.s32 %s9, 1
    %s15 = ssub.s32 %s9, 2
    %s16 = sadd.s32 %s9, 1
    %s17 = ssub.s32 %s9, %s16
    %p18 = scmp.eq.s32.totalorder %s17, 0
    %s20 = sadd.s32 %s19, 1
    %s21 = scalar_select %p18, %s19, %s20
    %p24 = pneg %p18
    %p25 = scmp.eq.s32.totalorder %s9, 1
    %p26 = por %p24, %p25
    %p27 = scmp.ne.s32.totalorder %s19, %s22
    %p28 = scmp.eq.s32.totalorder %s9, 0
    %p29 = por %p27, %p28
    %p30 = scmp.ne.s32.totalorder %s19, %s22
    %p31 = scmp.eq.s32.totalorder %s14, 1
    %p32 = por %p30, %p31
    %p33 = scmp.ne.s32.totalorder %s22, %s23
    %p34 = scmp.eq.s32.totalorder %s14, 0
    %p35 = por %p33, %p34
    %p36 = scmp.ne.s32.totalorder %s22, %s23
    %p37 = scmp.eq.s32.totalorder %s15, 1
    %p38 = por %p36, %p37
    %p40 = scmp.ne.s32.totalorder %s23, %s39
    %p41 = scmp.eq.s32.totalorder %s15, 0
    %p42 = por %p40, %p41
    %s44 = sadd.s32 %s43, 1
    %p47 = scmp.eq.s32.totalorder %s9, 1
    %p48 = scmp.ne.s32.totalorder %s43, %s45
    %p49 = scmp.eq.s32.totalorder %s9, 0
    %p50 = por %p48, %p49
    %p51 = scmp.ne.s32.totalorder %s43, %s45
    %p52 = scmp.eq.s32.totalorder %s14, 1
    %p53 = por %p51, %p52
    %p54 = scmp.ne.s32.totalorder %s45, %s46
    %p55 = scmp.eq.s32.totalorder %s14, 0
    %p56 = por %p54, %p55
    %p57 = scmp.ne.s32.totalorder %s45, %s46
    %p58 = scmp.eq.s32.totalorder %s15, 1
    %p59 = por %p57, %p58
    %p61 = scmp.ne.s32.totalorder %s46, %s60
    %p62 = scmp.eq.s32.totalorder %s15, 0
    %p63 = por %p61, %p62
    %s65 = sadd.s32 %s64, 1
    %p68 = scmp.eq.s32.totalorder %s9, 1
    %p69 = scmp.ne.s32.totalorder %s64, %s66
    %p70 = scmp.eq.s32.totalorder %s9, 0
    %p71 = por %p69, %p70
    %p72 = scmp.ne.s32.totalorder %s64, %s66
    %p73 = scmp.eq.s32.totalorder %s14, 1
    %p74 = por %p72, %p73
    %p75 = scmp.ne.s32.totalorder %s66, %s67
    %p76 = scmp.eq.s32.totalorder %s14, 0
    %p77 = por %p75, %p76
    %p78 = scmp.ne.s32.totalorder %s66, %s67
    %p79 = scmp.eq.s32.totalorder %s15, 1
    %p80 = por %p78, %p79
    %p82 = scmp.ne.s32.totalorder %s67, %s81
    %p83 = scmp.eq.s32.totalorder %s15, 0
    %p84 = por %p82, %p83
    %s85 = ssub.s32 %s9, %s16
    %p86 = scmp.eq.s32.totalorder %s85, 0
    %s88 = sadd.s32 %s87, 1
    %s89 = scalar_select %p86, %s87, %s88
    %p92 = pneg %p86
    %p93 = scmp.eq.s32.totalorder %s9, 1
    %p94 = por %p92, %p93
    %p95 = scmp.ne.s32.totalorder %s87, %s90
    %p96 = scmp.eq.s32.totalorder %s9, 0
    %p97 = por %p95, %p96
    %p98 = scmp.ne.s32.totalorder %s87, %s90
    %p99 = scmp.eq.s32.totalorder %s14, 1
    %p100 = por %p98, %p99
    %p101 = scmp.ne.s32.totalorder %s90, %s91
    %p102 = scmp.eq.s32.totalorder %s14, 0
    %p103 = por %p101, %p102
    %p104 = scmp.ne.s32.totalorder %s90, %s91
    %p105 = scmp.eq.s32.totalorder %s15, 1
    %p106 = por %p104, %p105
    %p108 = scmp.ne.s32.totalorder %s91, %s107
    %p109 = scmp.eq.s32.totalorder %s15, 0
    %p110 = por %p108, %p109
    %p111 = scmp.le.s32.totalorder 1, %s9
    %p112 = scmp.lt.s32.totalorder %s9, 3
    %p113 = pnand %p111, %p112
    %p114 = pneg %p113
    // Predicated region
    $region9: #{cnn_policy_forward.3} parent=5 // pred_check
      _
    $region10: #{cnn_policy_forward.3} parent=5 // pred_check_branch
      %116 = sbr.rel (%p113) target = $region12
    $region11: #{cnn_policy_forward.3} parent=5 // pred_region
      %s117 = ssub.s32 %s9, 1
      // Predicated region
      $region13: #{cnn_policy_forward.3} parent=11 // pred_check
        %p118 = pneg %p56
      $region14: #{cnn_policy_forward.3} parent=11 // pred_check_branch
        %120 = sbr.rel (%p118) target = $region16
      $region15: #{cnn_policy_forward.3} parent=11 // pred_region
        _
      $region16: #{cnn_policy_forward.3} parent=11 // pred_fallthru
        _
      // Predicated region
      $region17: #{cnn_policy_forward.3} parent=11 // pred_check
        %p121 = pneg %p77
      $region18: #{cnn_policy_forward.3} parent=11 // pred_check_branch
        %123 = sbr.rel (%p121) target = $region20
      $region19: #{cnn_policy_forward.3} parent=11 // pred_region
        _
      $region20: #{cnn_policy_forward.3} parent=11 // pred_fallthru
        _
    $region12: #{cnn_policy_forward.3} parent=5 // pred_fallthru
      _
    %p124 = scmp.lt.s32.totalorder %s9, 2
    // Predicated region
    $region21: #{cnn_policy_forward.3} parent=5 // pred_check
      %p125 = pneg %p124
    $region22: #{cnn_policy_forward.3} parent=5 // pred_check_branch
      %127 = sbr.rel (%p125) target = $region24
    $region23: #{cnn_policy_forward.3} parent=5 // pred_region
      // Predicated region
      $region25: #{cnn_policy_forward.3} parent=23 // pred_check
        %p128 = pneg %p29
      $region26: #{cnn_policy_forward.3} parent=23 // pred_check_branch
        %130 = sbr.rel (%p128) target = $region28
      $region27: #{cnn_policy_forward.3} parent=23 // pred_region
        %p131 = scmp.lt.s32.totalorder %s9, 1
        %s132 = scalar_select %p131, %s9, 1
        %s133 = smul.addr %s132, 9
        %s134 = smul.addr %s133, 8
        %s135 = scalar_lea.vmem %s0, %s134
      $region28: #{cnn_policy_forward.3} parent=23 // pred_fallthru
        _
    $region24: #{cnn_policy_forward.3} parent=5 // pred_fallthru
      _
    %p136 = scmp.le.s32.totalorder 1, %s9
    %p137 = scmp.lt.s32.totalorder %s9, 3
    %p138 = pnand %p136, %p137
    %p139 = pneg %p138
    // Predicated region
    $region29: #{cnn_policy_forward.3} parent=5 // pred_check
      _
    $region30: #{cnn_policy_forward.3} parent=5 // pred_check_branch
      %141 = sbr.rel (%p138) target = $region32
    $region31: #{cnn_policy_forward.3} parent=5 // pred_region
      %s142 = ssub.s32 %s9, 1
      %p143 = scmp.lt.s32.totalorder %s14, 1
      %s144 = scalar_select %p143, %s14, 1
      %s145 = smul.addr %s144, 9
      %s146 = smul.addr %s145, 8
      %s147 = scalar_lea.vmem %s0, %s146
      %p148 = pneg %p35
      %p149 = pneg %p32
      %p150 = pneg %p56
      %p151 = pneg %p53
      %p152 = pneg %p77
      %p153 = pneg %p74
      %p154 = pneg %p103
      %p155 = pneg %p100
      %p156 = scmp.lt.s32.totalorder %s14, 1
      %s157 = scalar_select %p156, %s14, 1
      %s158 = smul.addr %s157, 7
      %s159 = smul.addr %s158, 4
      %s160 = scalar_lea.vmem %s3, %s159
      %p161 = scmp.lt.s32.totalorder %s14, 1
      %s162 = scalar_select %p161, %s14, 1
      %s163 = smul.addr %s162, 9
      %s164 = smul.addr %s163, 8
      %s165 = scalar_lea.vmem %s0, %s164
      %p166 = scmp.lt.s32.totalorder %s14, 1
      %s167 = scalar_select %p166, %s14, 1
      %s168 = smul.addr %s167, 7
      %s169 = smul.addr %s168, 4
      %s170 = scalar_lea.vmem %s3, %s169
      %v172 = vld [vmem:[%s165] sm:$0xff]
      %v173 = vld [vmem:[%s165 + $0x8] sm:$0xff]
      %v174 = vld [vmem:[%s165 + $0x10] sm:$0xff]
      %v175 = vld [vmem:[%s165 + $0x18] sm:$0xff]
      %v176 = vld [vmem:[%s165 + $0x20] sm:$0xff]
      %v177 = vld [vmem:[%s165 + $0x28] sm:$0xff]
      %v178 = vld [vmem:[%s165 + $0x30] sm:$0xff]
      %v179 = vmul.f32 %v172, 0.003921569
      %v180 = vmul.f32 %v173, 0.003921569
      %v181 = vmul.f32 %v174, 0.003921569
      %v182 = vmul.f32 %v175, 0.003921569
      %v183 = vmul.f32 %v176, 0.003921569
      %v184 = vmul.f32 %v177, 0.003921569
      %v185 = vmul.f32 %v178, 0.003921569
      %v186 = vpack.c.bf16 %v180, %v179
      %v187 = vpack.c.bf16 %v182, %v181
      %v188 = vpack.c.bf16 %v184, %v183
      %v189 = vpack.c.bf16 %v185, %v185
      %v190 = vld [vmem:[%s1] sm:$0xf]
      %v191 = vld [vmem:[%s1 + $0x4] sm:$0xf]
      %v192 = vld [vmem:[%s165 + $0x1] sm:$0xff]
      %v193 = vld [vmem:[%s165 + $0x9] sm:$0xff]
      %v194 = vld [vmem:[%s165 + $0x11] sm:$0xff]
      %v195 = vld [vmem:[%s165 + $0x19] sm:$0xff]
      %v196 = vld [vmem:[%s165 + $0x21] sm:$0xff]
      %v197 = vld [vmem:[%s165 + $0x29] sm:$0xff]
      %v198 = vld [vmem:[%s165 + $0x31] sm:$0xff]
      %v199 = vmul.f32 %v192, 0.003921569
      %v200 = vmul.f32 %v193, 0.003921569
      %v201 = vmul.f32 %v194, 0.003921569
      %v202 = vmul.f32 %v195, 0.003921569
      %v203 = vmul.f32 %v196, 0.003921569
      %v204 = vmul.f32 %v197, 0.003921569
      %v205 = vmul.f32 %v198, 0.003921569
      %v206 = vpack.c.bf16 %v200, %v199
      %v207 = vpack.c.bf16 %v202, %v201
      %v208 = vpack.c.bf16 %v204, %v203
      %v209 = vpack.c.bf16 %v205, %v205
      %s210 = scalar_lea.vmem %s1, 8
      %v211 = vld [vmem:[%s210] sm:$0xf]
      %v212 = vld [vmem:[%s210 + $0x4] sm:$0xf]
      %v215 = vunpack.c.l.b16 %v211
      %v216 = vunpack.c.l.b16 %v212
      %v217 = vpack.c.b16 %v216, %v215
      %vm219 = vcmask 130048
      %v221 = vsel %vm219, %v206, 0
      %v224 = vsel %vm219, %v207, 0
      %v227 = vsel %vm219, %v208, 0
      %v230 = vsel %vm219, %v209, 0
      %232 = vmatpush.bf16.msra.mxu0 0
      %233 = vmatpush.bf16.msra.mxu0 0
      %234 = vmatpush.bf16.msra.mxu0 0
      %235 = vmatpush.bf16.msra.mxu0 0
      %236 = vmatpush.bf16.msra.mxu0 0
      %237 = vmatpush.bf16.msra.mxu0 0
      %238 = vmatpush.bf16.msra.mxu0 0
      %239 = vmatpush.bf16.msra.mxu0 %v217
      %240 = vmatmul.bf16.gmra.mxu0 %v221
      %v241 = vpop.f32.mrf.mxu0
      %v242 = vadd.f32 0.0, %v241
      %v243 = vpop.f32.mrf.mxu0
      %v244 = vadd.f32 0.0, %v243
      %245 = vmatmul.bf16.gmra.mxu0 %v224
      %v246 = vpop.f32.mrf.mxu0
      %v247 = vadd.f32 0.0, %v246
      %v248 = vpop.f32.mrf.mxu0
      %v249 = vadd.f32 0.0, %v248
      %250 = vmatmul.bf16.gmra.mxu0 %v227
      %v251 = vpop.f32.mrf.mxu0
      %v252 = vadd.f32 0.0, %v251
      %v253 = vpop.f32.mrf.mxu0
      %v254 = vadd.f32 0.0, %v253
      %255 = vmatmul.bf16.gmra.mxu0 %v230
      %v256 = vpop.f32.mrf.mxu0
      %v257 = vadd.f32 0.0, %v256
      %v258 = vpop.f32.mrf.mxu0
      %259 = vdwg.mxu0
      %v262 = vunpack.c.l.b16 %v190
      %v263 = vunpack.c.l.b16 %v191
      %v264 = vpack.c.b16 %v263, %v262
      %v267 = vsel %vm219, %v186, 0
      %v270 = vsel %vm219, %v187, 0
      %v273 = vsel %vm219, %v188, 0
      %v276 = vsel %vm219, %v189, 0
      %278 = vmatpush.bf16.msra.mxu0 0
      %279 = vmatpush.bf16.msra.mxu0 0
      %280 = vmatpush.bf16.msra.mxu0 0
      %281 = vmatpush.bf16.msra.mxu0 0
      %282 = vmatpush.bf16.msra.mxu0 0
      %283 = vmatpush.bf16.msra.mxu0 0
      %284 = vmatpush.bf16.msra.mxu0 0
      %285 = vmatpush.bf16.msra.mxu0 %v264
      %286 = vmatmul.bf16.gmra.mxu0 %v267
      %v287 = vpop.f32.mrf.mxu0
      %v288 = vadd.f32 %v242, %v287
      %v289 = vpop.f32.mrf.mxu0
      %v290 = vadd.f32 %v244, %v289
      %291 = vmatmul.bf16.gmra.mxu0 %v270
      %v292 = vpop.f32.mrf.mxu0
      %v293 = vadd.f32 %v247, %v292
      %v294 = vpop.f32.mrf.mxu0
      %v295 = vadd.f32 %v249, %v294
      %296 = vmatmul.bf16.gmra.mxu0 %v273
      %v297 = vpop.f32.mrf.mxu0
      %v298 = vadd.f32 %v252, %v297
      %v299 = vpop.f32.mrf.mxu0
      %v300 = vadd.f32 %v254, %v299
      %301 = vmatmul.bf16.gmra.mxu0 %v276
      %v302 = vpop.f32.mrf.mxu0
      %v303 = vadd.f32 %v257, %v302
      %v304 = vpop.f32.mrf.mxu0
      %305 = vdwg.mxu0
      %v306 = vld [vmem:[%s165 + $0x8] sm:$0xff]
      %v307 = vld [vmem:[%s165 + $0x10] sm:$0xff]
      %v308 = vld [vmem:[%s165 + $0x18] sm:$0xff]
      %v309 = vld [vmem:[%s165 + $0x20] sm:$0xff]
      %v310 = vld [vmem:[%s165 + $0x28] sm:$0xff]
      %v311 = vld [vmem:[%s165 + $0x30] sm:$0xff]
      %v312 = vld [vmem:[%s165 + $0x38] sm:$0xff]
      %v313 = vmul.f32 %v306, 0.003921569
      %v314 = vmul.f32 %v307, 0.003921569
      %v315 = vmul.f32 %v308, 0.003921569
      %v316 = vmul.f32 %v309, 0.003921569
      %v317 = vmul.f32 %v310, 0.003921569
      %v318 = vmul.f32 %v311, 0.003921569
      %v319 = vmul.f32 %v312, 0.003921569
      %v320 = vpack.c.bf16 %v314, %v313
      %v321 = vpack.c.bf16 %v316, %v315
      %v322 = vpack.c.bf16 %v318, %v317
      %v323 = vpack.c.bf16 %v319, %v319
      %s324 = scalar_lea.vmem %s1, 16
      %v325 = vld [vmem:[%s324] sm:$0xf]
      %v326 = vld [vmem:[%s324 + $0x4] sm:$0xf]
      %v329 = vunpack.c.l.b16 %v325
      %v330 = vunpack.c.l.b16 %v326
      %v331 = vpack.c.b16 %v330, %v329
      %v334 = vsel %vm219, %v320, 0
      %v337 = vsel %vm219, %v321, 0
      %v340 = vsel %vm219, %v322, 0
      %v343 = vsel %vm219, %v323, 0
      %345 = vmatpush.bf16.msra.mxu0 0
      %346 = vmatpush.bf16.msra.mxu0 0
      %347 = vmatpush.bf16.msra.mxu0 0
      %348 = vmatpush.bf16.msra.mxu0 0
      %349 = vmatpush.bf16.msra.mxu0 0
      %350 = vmatpush.bf16.msra.mxu0 0
      %351 = vmatpush.bf16.msra.mxu0 0
      %352 = vmatpush.bf16.msra.mxu0 %v331
      %353 = vmatmul.bf16.gmra.mxu0 %v334
      %v354 = vpop.f32.mrf.mxu0
      %v355 = vadd.f32 0.0, %v354
      %v356 = vpop.f32.mrf.mxu0
      %v357 = vadd.f32 0.0, %v356
      %358 = vmatmul.bf16.gmra.mxu0 %v337
      %v359 = vpop.f32.mrf.mxu0
      %v360 = vadd.f32 0.0, %v359
      %v361 = vpop.f32.mrf.mxu0
      %v362 = vadd.f32 0.0, %v361
      %363 = vmatmul.bf16.gmra.mxu0 %v340
      %v364 = vpop.f32.mrf.mxu0
      %v365 = vadd.f32 0.0, %v364
      %v366 = vpop.f32.mrf.mxu0
      %v367 = vadd.f32 0.0, %v366
      %368 = vmatmul.bf16.gmra.mxu0 %v343
      %v369 = vpop.f32.mrf.mxu0
      %v370 = vadd.f32 0.0, %v369
      %v371 = vpop.f32.mrf.mxu0
      %372 = vdwg.mxu0
      %v373 = vadd.f32 %v288, %v355
      %v374 = vadd.f32 %v290, %v357
      %v375 = vadd.f32 %v293, %v360
      %v376 = vadd.f32 %v295, %v362
      %v377 = vadd.f32 %v298, %v365
      %v378 = vadd.f32 %v300, %v367
      %v379 = vadd.f32 %v303, %v370
      %v380 = vld [vmem:[%s165 + $0x9] sm:$0xff]
      %v381 = vld [vmem:[%s165 + $0x11] sm:$0xff]
      %v382 = vld [vmem:[%s165 + $0x19] sm:$0xff]
      %v383 = vld [vmem:[%s165 + $0x21] sm:$0xff]
      %v384 = vld [vmem:[%s165 + $0x29] sm:$0xff]
      %v385 = vld [vmem:[%s165 + $0x31] sm:$0xff]
      %v386 = vld [vmem:[%s165 + $0x39] sm:$0xff]
      %v387 = vmul.f32 %v380, 0.003921569
      %v388 = vmul.f32 %v381, 0.003921569
      %v389 = vmul.f32 %v382, 0.003921569
      %v390 = vmul.f32 %v383, 0.003921569
      %v391 = vmul.f32 %v384, 0.003921569
      %v392 = vmul.f32 %v385, 0.003921569
      %v393 = vmul.f32 %v386, 0.003921569
      %v394 = vpack.c.bf16 %v388, %v387
      %v395 = vpack.c.bf16 %v390, %v389
      %v396 = vpack.c.bf16 %v392, %v391
      %v397 = vpack.c.bf16 %v393, %v393
      %s398 = scalar_lea.vmem %s1, 24
      %v399 = vld [vmem:[%s398] sm:$0xf]
      %v400 = vld [vmem:[%s398 + $0x4] sm:$0xf]
      %v403 = vunpack.c.l.b16 %v399
      %v404 = vunpack.c.l.b16 %v400
      %v405 = vpack.c.b16 %v404, %v403
      %v408 = vsel %vm219, %v394, 0
      %v411 = vsel %vm219, %v395, 0
      %v414 = vsel %vm219, %v396, 0
      %v417 = vsel %vm219, %v397, 0
      %419 = vmatpush.bf16.msra.mxu0 0
      %420 = vmatpush.bf16.msra.mxu0 0
      %421 = vmatpush.bf16.msra.mxu0 0
      %422 = vmatpush.bf16.msra.mxu0 0
      %423 = vmatpush.bf16.msra.mxu0 0
      %424 = vmatpush.bf16.msra.mxu0 0
      %425 = vmatpush.bf16.msra.mxu0 0
      %426 = vmatpush.bf16.msra.mxu0 %v405
      %427 = vmatmul.bf16.gmra.mxu0 %v408
      %v428 = vpop.f32.mrf.mxu0
      %v429 = vadd.f32 0.0, %v428
      %v430 = vpop.f32.mrf.mxu0
      %v431 = vadd.f32 0.0, %v430
      %432 = vmatmul.bf16.gmra.mxu0 %v411
      %v433 = vpop.f32.mrf.mxu0
      %v434 = vadd.f32 0.0, %v433
      %v435 = vpop.f32.mrf.mxu0
      %v436 = vadd.f32 0.0, %v435
      %437 = vmatmul.bf16.gmra.mxu0 %v414
      %v438 = vpop.f32.mrf.mxu0
      %v439 = vadd.f32 0.0, %v438
      %v440 = vpop.f32.mrf.mxu0
      %v441 = vadd.f32 0.0, %v440
      %442 = vmatmul.bf16.gmra.mxu0 %v417
      %v443 = vpop.f32.mrf.mxu0
      %v444 = vadd.f32 0.0, %v443
      %v445 = vpop.f32.mrf.mxu0
      %446 = vdwg.mxu0
      %v447 = vadd.f32 %v373, %v429
      %v448 = vadd.f32 %v374, %v431
      %v449 = vadd.f32 %v375, %v434
      %v450 = vadd.f32 %v376, %v436
      %v451 = vadd.f32 %v377, %v439
      %v452 = vadd.f32 %v378, %v441
      %v453 = vadd.f32 %v379, %v444
      %v454 = vld [vmem:[%s2] sm:$0x1]
      %v456 = vperm.slane %v454, 0
      %v458 = vadd.f32 %v447, %v456
      %v459 = vadd.f32 %v448, %v456
      %v460 = vadd.f32 %v449, %v456
      %v461 = vadd.f32 %v450, %v456
      %v462 = vadd.f32 %v451, %v456
      %v463 = vadd.f32 %v452, %v456
      %v464 = vadd.f32 %v453, %v456
      %v465 = vmax.f32 %v458, 0.0
      %v466 = vmax.f32 %v459, 0.0
      %v467 = vmax.f32 %v460, 0.0
      %v468 = vmax.f32 %v461, 0.0
      %v469 = vmax.f32 %v462, 0.0
      %v470 = vmax.f32 %v463, 0.0
      %v471 = vmax.f32 %v464, 0.0
      %v472 = vpack.c.bf16 %v465, %v465
      %v473 = vpack.c.bf16 %v466, %v466
      %v474 = vpack.c.bf16 %v467, %v467
      %v475 = vpack.c.bf16 %v468, %v468
      %v476 = vpack.c.bf16 %v469, %v469
      %v477 = vpack.c.bf16 %v470, %v470
      %v478 = vpack.c.bf16 %v471, %v471
      %vm479 = vcmask 60416
      %480 = vst.msk [vmem:[%s170] sm:$0xf] %vm479, %v472
      %481 = vst.msk [vmem:[%s170 + $0x4] sm:$0xf] %vm479, %v473
      %482 = vst.msk [vmem:[%s170 + $0x8] sm:$0xf] %vm479, %v474
      %483 = vst.msk [vmem:[%s170 + $0xc] sm:$0xf] %vm479, %v475
      %484 = vst.msk [vmem:[%s170 + $0x10] sm:$0xf] %vm479, %v476
      %485 = vst.msk [vmem:[%s170 + $0x14] sm:$0xf] %vm479, %v477
      %486 = vst.msk [vmem:[%s170 + $0x18] sm:$0xf] %vm479, %v478
      %p487 = scmp.lt.s32.totalorder %s14, 1
      %s488 = scalar_select %p487, %s14, 1
      %s489 = smul.addr %s488, 7
      %s490 = smul.addr %s489, 4
      %s491 = scalar_lea.vmem %s3, %s490
      // Predicated region
      $region33: #{cnn_policy_forward.3} parent=31 // pred_check
        %p492 = pneg %p100
      $region34: #{cnn_policy_forward.3} parent=31 // pred_check_branch
        %494 = sbr.rel (%p492) target = $region36
      $region35: #{cnn_policy_forward.3} parent=31 // pred_region
        _
      $region36: #{cnn_policy_forward.3} parent=31 // pred_fallthru
        _
    $region32: #{cnn_policy_forward.3} parent=5 // pred_fallthru
      _
    %p495 = scmp.le.s32.totalorder 2, %s9
    // Predicated region
    $region37: #{cnn_policy_forward.3} parent=5 // pred_check
      %p496 = pneg %p495
    $region38: #{cnn_policy_forward.3} parent=5 // pred_check_branch
      %498 = sbr.rel (%p496) target = $region40
    $region39: #{cnn_policy_forward.3} parent=5 // pred_region
      %s499 = ssub.s32 %s9, 2
      // Predicated region
      $region41: #{cnn_policy_forward.3} parent=39 // pred_check
        %p500 = pneg %p106
      $region42: #{cnn_policy_forward.3} parent=39 // pred_check_branch
        %502 = sbr.rel (%p500) target = $region44
      $region43: #{cnn_policy_forward.3} parent=39 // pred_region
        %p503 = scmp.lt.s32.totalorder %s15, 1
        %s504 = scalar_select %p503, %s15, 1
        %s505 = smul.addr %s504, 7
        %s506 = smul.addr %s505, 4
        %s507 = scalar_lea.vmem %s3, %s506
      $region44: #{cnn_policy_forward.3} parent=39 // pred_fallthru
        _
    $region40: #{cnn_policy_forward.3} parent=5 // pred_fallthru
      _
  $region6: #{cnn_policy_forward.3} parent=0 // loop_footer
    %s13 = sadd.s32 1, %s9
  $region7: #{cnn_policy_forward.3} parent=0 // loop_footer_branch
    %8 = sbr.rel target = $region3
  $region8: #{cnn_policy_forward.3} parent=0 // loop_exit
    _

// kernel: cnn_policy_forward.4
$region0: #{cnn_policy_forward.4}
  #allocation0 [shape = 'u32[]', space=smem, size = 0x4, offset = 0x4, fixed_abs, tag = 'smem constant byte address 0x4 - core index']
  #allocation1 [shape = 'u32[72,128]{1,0:T(1,128)}', space=vmem, size = 0x9000, scoped, tag = 'internal scratch']
  %s0 = inlined_call_operand.vmem [shape: bf16[2,17,32], index: 0, kind: input, shape index: {}]
  %s1 = inlined_call_operand.vmem [shape: bf16[4,32,16], index: 1, kind: input, shape index: {}]
  %s2 = inlined_call_operand.vmem [shape: f32[1,16], index: 2, kind: input, shape index: {}]
  %s3 = inlined_call_operand.vmem [shape: bf16[2,12,16], index: 3, kind: output, shape index: {}]
  %s4 = sld [smem:[#allocation0]]
  $region45: #{cnn_policy_forward.4} parent=0
    _
  %s6 = ssub.s32 1, %s4
  %s7 = scalar_select 0, %s6, %s4
  loop: start=0, step=1, limit=4
  $region2: #{cnn_policy_forward.4} parent=0 // loop_pre_header
    _
  $region3: #{cnn_policy_forward.4} parent=0 // loop_header
    %s9 = sphi 0, %s13
    %p10 = scmp.ge.s32.totalorder %s9, 4
    %s19 = sphi 0, %s21
    %s22 = sphi 0, %s19
    %s23 = sphi 0, %s22
    %s39 = sphi 0, %s23
    %s43 = sphi 0, %s43
    %s45 = sphi 0, %s43
    %s46 = sphi 0, %s45
    %s60 = sphi 0, %s46
    %s64 = sphi 0, %s64
    %s66 = sphi 0, %s64
    %s67 = sphi 0, %s66
    %s81 = sphi 0, %s67
    %s87 = sphi 0, %s89
    %s90 = sphi 0, %s87
    %s91 = sphi 0, %s90
    %s107 = sphi 0, %s91
  $region4: #{cnn_policy_forward.4} parent=0 // loop_header_branch
    %12 = sbr.rel (%p10) target = $region8
  $region5: #{cnn_policy_forward.4} parent=0 // loop_body
    %s14 = ssub.s32 %s9, 1
    %s15 = ssub.s32 %s9, 2
    %s16 = sadd.s32 %s9, 1
    %s17 = ssub.s32 %s9, %s16
    %p18 = scmp.eq.s32.totalorder %s17, 0
    %s20 = sadd.s32 %s19, 1
    %s21 = scalar_select %p18, %s19, %s20
    %p24 = pneg %p18
    %p25 = scmp.eq.s32.totalorder %s9, 1
    %p26 = por %p24, %p25
    %p27 = scmp.ne.s32.totalorder %s19, %s22
    %p28 = scmp.eq.s32.totalorder %s9, 0
    %p29 = por %p27, %p28
    %p30 = scmp.ne.s32.totalorder %s19, %s22
    %p31 = scmp.eq.s32.totalorder %s14, 1
    %p32 = por %p30, %p31
    %p33 = scmp.ne.s32.totalorder %s22, %s23
    %p34 = scmp.eq.s32.totalorder %s14, 0
    %p35 = por %p33, %p34
    %p36 = scmp.ne.s32.totalorder %s22, %s23
    %p37 = scmp.eq.s32.totalorder %s15, 1
    %p38 = por %p36, %p37
    %p40 = scmp.ne.s32.totalorder %s23, %s39
    %p41 = scmp.eq.s32.totalorder %s15, 0
    %p42 = por %p40, %p41
    %s44 = sadd.s32 %s43, 1
    %p47 = scmp.eq.s32.totalorder %s9, 1
    %p48 = scmp.ne.s32.totalorder %s43, %s45
    %p49 = scmp.eq.s32.totalorder %s9, 0
    %p50 = por %p48, %p49
    %p51 = scmp.ne.s32.totalorder %s43, %s45
    %p52 = scmp.eq.s32.totalorder %s14, 1
    %p53 = por %p51, %p52
    %p54 = scmp.ne.s32.totalorder %s45, %s46
    %p55 = scmp.eq.s32.totalorder %s14, 0
    %p56 = por %p54, %p55
    %p57 = scmp.ne.s32.totalorder %s45, %s46
    %p58 = scmp.eq.s32.totalorder %s15, 1
    %p59 = por %p57, %p58
    %p61 = scmp.ne.s32.totalorder %s46, %s60
    %p62 = scmp.eq.s32.totalorder %s15, 0
    %p63 = por %p61, %p62
    %s65 = sadd.s32 %s64, 1
    %p68 = scmp.eq.s32.totalorder %s9, 1
    %p69 = scmp.ne.s32.totalorder %s64, %s66
    %p70 = scmp.eq.s32.totalorder %s9, 0
    %p71 = por %p69, %p70
    %p72 = scmp.ne.s32.totalorder %s64, %s66
    %p73 = scmp.eq.s32.totalorder %s14, 1
    %p74 = por %p72, %p73
    %p75 = scmp.ne.s32.totalorder %s66, %s67
    %p76 = scmp.eq.s32.totalorder %s14, 0
    %p77 = por %p75, %p76
    %p78 = scmp.ne.s32.totalorder %s66, %s67
    %p79 = scmp.eq.s32.totalorder %s15, 1
    %p80 = por %p78, %p79
    %p82 = scmp.ne.s32.totalorder %s67, %s81
    %p83 = scmp.eq.s32.totalorder %s15, 0
    %p84 = por %p82, %p83
    %s85 = ssub.s32 %s9, %s16
    %p86 = scmp.eq.s32.totalorder %s85, 0
    %s88 = sadd.s32 %s87, 1
    %s89 = scalar_select %p86, %s87, %s88
    %p92 = pneg %p86
    %p93 = scmp.eq.s32.totalorder %s9, 1
    %p94 = por %p92, %p93
    %p95 = scmp.ne.s32.totalorder %s87, %s90
    %p96 = scmp.eq.s32.totalorder %s9, 0
    %p97 = por %p95, %p96
    %p98 = scmp.ne.s32.totalorder %s87, %s90
    %p99 = scmp.eq.s32.totalorder %s14, 1
    %p100 = por %p98, %p99
    %p101 = scmp.ne.s32.totalorder %s90, %s91
    %p102 = scmp.eq.s32.totalorder %s14, 0
    %p103 = por %p101, %p102
    %p104 = scmp.ne.s32.totalorder %s90, %s91
    %p105 = scmp.eq.s32.totalorder %s15, 1
    %p106 = por %p104, %p105
    %p108 = scmp.ne.s32.totalorder %s91, %s107
    %p109 = scmp.eq.s32.totalorder %s15, 0
    %p110 = por %p108, %p109
    %p111 = scmp.le.s32.totalorder 1, %s9
    %p112 = scmp.lt.s32.totalorder %s9, 3
    %p113 = pnand %p111, %p112
    %p114 = pneg %p113
    // Predicated region
    $region9: #{cnn_policy_forward.4} parent=5 // pred_check
      _
    $region10: #{cnn_policy_forward.4} parent=5 // pred_check_branch
      %116 = sbr.rel (%p113) target = $region12
    $region11: #{cnn_policy_forward.4} parent=5 // pred_region
      %s117 = ssub.s32 %s9, 1
      // Predicated region
      $region13: #{cnn_policy_forward.4} parent=11 // pred_check
        %p118 = pneg %p56
      $region14: #{cnn_policy_forward.4} parent=11 // pred_check_branch
        %120 = sbr.rel (%p118) target = $region16
      $region15: #{cnn_policy_forward.4} parent=11 // pred_region
        _
      $region16: #{cnn_policy_forward.4} parent=11 // pred_fallthru
        _
      // Predicated region
      $region17: #{cnn_policy_forward.4} parent=11 // pred_check
        %p121 = pneg %p77
      $region18: #{cnn_policy_forward.4} parent=11 // pred_check_branch
        %123 = sbr.rel (%p121) target = $region20
      $region19: #{cnn_policy_forward.4} parent=11 // pred_region
        _
      $region20: #{cnn_policy_forward.4} parent=11 // pred_fallthru
        _
    $region12: #{cnn_policy_forward.4} parent=5 // pred_fallthru
      _
    %p124 = scmp.lt.s32.totalorder %s9, 2
    // Predicated region
    $region21: #{cnn_policy_forward.4} parent=5 // pred_check
      %p125 = pneg %p124
    $region22: #{cnn_policy_forward.4} parent=5 // pred_check_branch
      %127 = sbr.rel (%p125) target = $region24
    $region23: #{cnn_policy_forward.4} parent=5 // pred_region
      // Predicated region
      $region25: #{cnn_policy_forward.4} parent=23 // pred_check
        %p128 = pneg %p29
      $region26: #{cnn_policy_forward.4} parent=23 // pred_check_branch
        %130 = sbr.rel (%p128) target = $region28
      $region27: #{cnn_policy_forward.4} parent=23 // pred_region
        %p131 = scmp.lt.s32.totalorder %s9, 1
        %s132 = scalar_select %p131, %s9, 1
        %s133 = smul.addr %s132, 3
        %s134 = smul.addr %s133, 4
        %s135 = scalar_lea.vmem %s0, %s134
      $region28: #{cnn_policy_forward.4} parent=23 // pred_fallthru
        _
    $region24: #{cnn_policy_forward.4} parent=5 // pred_fallthru
      _
    %p136 = scmp.le.s32.totalorder 1, %s9
    %p137 = scmp.lt.s32.totalorder %s9, 3
    %p138 = pnand %p136, %p137
    %p139 = pneg %p138
    // Predicated region
    $region29: #{cnn_policy_forward.4} parent=5 // pred_check
      _
    $region30: #{cnn_policy_forward.4} parent=5 // pred_check_branch
      %141 = sbr.rel (%p138) target = $region32
    $region31: #{cnn_policy_forward.4} parent=5 // pred_region
      %s142 = ssub.s32 %s9, 1
      %p143 = scmp.lt.s32.totalorder %s14, 1
      %s144 = scalar_select %p143, %s14, 1
      %s145 = smul.addr %s144, 3
      %s146 = smul.addr %s145, 4
      %s147 = scalar_lea.vmem %s0, %s146
      %p148 = pneg %p35
      %p149 = pneg %p32
      %p150 = pneg %p56
      %p151 = pneg %p53
      %p152 = pneg %p77
      %p153 = pneg %p74
      %p154 = pneg %p103
      %p155 = pneg %p100
      %p156 = scmp.lt.s32.totalorder %s14, 1
      %s157 = scalar_select %p156, %s14, 1
      %s158 = smul.addr %s157, 2
      %s159 = smul.addr %s158, 4
      %s160 = scalar_lea.vmem %s3, %s159
      %p161 = scmp.lt.s32.totalorder %s14, 1
      %s162 = scalar_select %p161, %s14, 1
      %s163 = smul.addr %s162, 3
      %s164 = smul.addr %s163, 4
      %s165 = scalar_lea.vmem %s0, %s164
      %p166 = scmp.lt.s32.totalorder %s14, 1
      %s167 = scalar_select %p166, %s14, 1
      %s168 = smul.addr %s167, 2
      %s169 = smul.addr %s168, 4
      %s170 = scalar_lea.vmem %s3, %s169
      %v172 = vld [vmem:[%s165] sm:$0xf]
      %v173 = vld [vmem:[%s165 + $0x4] sm:$0x3]
      %v174 = vld [vmem:[%s1] sm:$0xf]
      %v175 = vld [vmem:[%s1 + $0x4] sm:$0xf]
      %v176 = vld [vmem:[%s1 + $0x8] sm:$0xf]
      %v177 = vld [vmem:[%s1 + $0xc] sm:$0xf]
      %v178 = vld [vmem:[%s165 + $0x4] sm:$0x7]
      %s179 = scalar_lea.vmem %s1, 16
      %v180 = vld [vmem:[%s179] sm:$0xf]
      %v181 = vld [vmem:[%s179 + $0x4] sm:$0xf]
      %v182 = vld [vmem:[%s179 + $0x8] sm:$0xf]
      %v183 = vld [vmem:[%s179 + $0xc] sm:$0xf]
      %v186 = vunpack.c.l.b16 %v172
      %v187 = vunpack.c.l.b16 %v178
      %v188 = vpack.c.b16 %v187, %v186
      %v190 = vshrl.u32 %v188, 16
      %v192 = vshll.u32 %v188, 16
      %v194 = vrot.slane %v192, 1
      %v195 = vor.u32 %v190, %v194
      %v200 = vunpack.c.l.b16 %v180
      %v201 = vunpack.c.l.b16 %v181
      %v202 = vunpack.c.l.b16 %v182
      %v203 = vunpack.c.l.b16 %v183
      %v204 = vpack.c.b16 %v201, %v200
      %v205 = vpack.c.b16 %v203, %v202
      %vm208 = vcmask 261120
      %v210 = vsel %vm208, %v195, 0
      %212 = vmatpush.bf16.msra.mxu0 0
      %213 = vmatpush.bf16.msra.mxu0 0
      %214 = vmatpush.bf16.msra.mxu0 0
      %215 = vmatpush.bf16.msra.mxu0 0
      %216 = vmatpush.bf16.msra.mxu0 0
      %217 = vmatpush.bf16.msra.mxu0 0
      %218 = vmatpush.bf16.msra.mxu0 %v205
      %219 = vmatpush.bf16.msra.mxu0 %v204
      %220 = vmatmul.bf16.gmra.mxu0 %v210
      %v221 = vpop.f32.mrf.mxu0
      %v222 = vadd.f32 0.0, %v221
      %v223 = vpop.f32.mrf.mxu0
      %v224 = vadd.f32 0.0, %v223
      %225 = vdwg.mxu0
      %v227 = vunpack.c.l.b16 %v173
      %v228 = vpack.c.b16 %v227, %v186
      %v233 = vunpack.c.l.b16 %v174
      %v234 = vunpack.c.l.b16 %v175
      %v235 = vunpack.c.l.b16 %v176
      %v236 = vunpack.c.l.b16 %v177
      %v237 = vpack.c.b16 %v234, %v233
      %v238 = vpack.c.b16 %v236, %v235
      %v242 = vsel %vm208, %v228, 0
      %244 = vmatpush.bf16.msra.mxu0 0
      %245 = vmatpush.bf16.msra.mxu0 0
      %246 = vmatpush.bf16.msra.mxu0 0
      %247 = vmatpush.bf16.msra.mxu0 0
      %248 = vmatpush.bf16.msra.mxu0 0
      %249 = vmatpush.bf16.msra.mxu0 0
      %250 = vmatpush.bf16.msra.mxu0 %v238
      %251 = vmatpush.bf16.msra.mxu0 %v237
      %252 = vmatmul.bf16.gmra.mxu0 %v242
      %v253 = vpop.f32.mrf.mxu0
      %v254 = vadd.f32 %v222, %v253
      %v255 = vpop.f32.mrf.mxu0
      %v256 = vadd.f32 %v224, %v255
      %257 = vdwg.mxu0
      %v258 = vld [vmem:[%s165] sm:$0xc]
      %v259 = vld [vmem:[%s165 + $0x4] sm:$0xf]
      %s260 = scalar_lea.vmem %s1, 32
      %v261 = vld [vmem:[%s260] sm:$0xf]
      %v262 = vld [vmem:[%s260 + $0x4] sm:$0xf]
      %v263 = vld [vmem:[%s260 + $0x8] sm:$0xf]
      %v264 = vld [vmem:[%s260 + $0xc] sm:$0xf]
      %v267 = vunpack.c.l.b16 %v258
      %v268 = vunpack.c.l.b16 %v259
      %v269 = vpack.c.b16 %v268, %v267
      %v270 = vrot.slane %v269, 2
      %v275 = vunpack.c.l.b16 %v261
      %v276 = vunpack.c.l.b16 %v262
      %v277 = vunpack.c.l.b16 %v263
      %v278 = vunpack.c.l.b16 %v264
      %v279 = vpack.c.b16 %v276, %v275
      %v280 = vpack.c.b16 %v278, %v277
      %v284 = vsel %vm208, %v270, 0
      %286 = vmatpush.bf16.msra.mxu0 0
      %287 = vmatpush.bf16.msra.mxu0 0
      %288 = vmatpush.bf16.msra.mxu0 0
      %289 = vmatpush.bf16.msra.mxu0 0
      %290 = vmatpush.bf16.msra.mxu0 0
      %291 = vmatpush.bf16.msra.mxu0 0
      %292 = vmatpush.bf16.msra.mxu0 %v280
      %293 = vmatpush.bf16.msra.mxu0 %v279
      %294 = vmatmul.bf16.gmra.mxu0 %v284
      %v295 = vpop.f32.mrf.mxu0
      %v296 = vadd.f32 0.0, %v295
      %v297 = vpop.f32.mrf.mxu0
      %v298 = vadd.f32 0.0, %v297
      %299 = vdwg.mxu0
      %v300 = vadd.f32 %v254, %v296
      %v301 = vadd.f32 %v256, %v298
      %v302 = vld [vmem:[%s165] sm:$0xc]
      %v303 = vld [vmem:[%s165 + $0x4] sm:$0xf]
      %v304 = vld [vmem:[%s165 + $0x8] sm:$0x1]
      %s305 = scalar_lea.vmem %s1, 48
      %v306 = vld [vmem:[%s305] sm:$0xf]
      %v307 = vld [vmem:[%s305 + $0x4] sm:$0xf]
      %v308 = vld [vmem:[%s305 + $0x8] sm:$0xf]
      %v309 = vld [vmem:[%s305 + $0xc] sm:$0xf]
      %v313 = vunpack.c.l.b16 %v302
      %v314 = vunpack.c.l.b16 %v303
      %v315 = vunpack.c.l.b16 %v304
      %v316 = vpack.c.b16 %v314, %v313
      %v317 = vpack.c.b16 %v315, %v315
      %vm318 = vsmask.f32 5376
      %v320 = vshrl.u32 %v316, 16
      %v322 = vrot.slane %v320, 2
      %v323 = vshll.u32 %v316, 16
      %v325 = vrot.slane %v323, 3
      %v326 = vor.u32 %v322, %v325
      %v328 = vshll.u32 %v317, 16
      %v330 = vrot.slane %v328, 3
      %v331 = vsel %vm318, %v326, %v330
      %v336 = vunpack.c.l.b16 %v306
      %v337 = vunpack.c.l.b16 %v307
      %v338 = vunpack.c.l.b16 %v308
      %v339 = vunpack.c.l.b16 %v309
      %v340 = vpack.c.b16 %v337, %v336
      %v341 = vpack.c.b16 %v339, %v338
      %v345 = vsel %vm208, %v331, 0
      %347 = vmatpush.bf16.msra.mxu0 0
      %348 = vmatpush.bf16.msra.mxu0 0
      %349 = vmatpush.bf16.msra.mxu0 0
      %350 = vmatpush.bf16.msra.mxu0 0
      %351 = vmatpush.bf16.msra.mxu0 0
      %352 = vmatpush.bf16.msra.mxu0 0
      %353 = vmatpush.bf16.msra.mxu0 %v341
      %354 = vmatpush.bf16.msra.mxu0 %v340
      %355 = vmatmul.bf16.gmra.mxu0 %v345
      %v356 = vpop.f32.mrf.mxu0
      %v357 = vadd.f32 0.0, %v356
      %v358 = vpop.f32.mrf.mxu0
      %v359 = vadd.f32 0.0, %v358
      %360 = vdwg.mxu0
      %v361 = vadd.f32 %v300, %v357
      %v362 = vadd.f32 %v301, %v359
      %v363 = vld [vmem:[%s2] sm:$0x1]
      %v365 = vperm.slane %v363, 0
      %v367 = vadd.f32 %v361, %v365
      %v368 = vadd.f32 %v362, %v365
      %v369 = vmax.f32 %v367, 0.0
      %v370 = vmax.f32 %v368, 0.0
      %v371 = vpack.c.bf16 %v369, %v369
      %v372 = vpack.c.bf16 %v370, %v370
      %vm373 = vcmask 125952
      %374 = vst.msk [vmem:[%s170] sm:$0xf] %vm373, %v371
      %vm375 = vcmask 123904
      %376 = vst.msk [vmem:[%s170 + $0x4] sm:$0x3] %vm375, %v372
      %p377 = scmp.lt.s32.totalorder %s14, 1
      %s378 = scalar_select %p377, %s14, 1
      %s379 = smul.addr %s378, 2
      %s380 = smul.addr %s379, 4
      %s381 = scalar_lea.vmem %s3, %s380
      // Predicated region
      $region33: #{cnn_policy_forward.4} parent=31 // pred_check
        %p382 = pneg %p100
      $region34: #{cnn_policy_forward.4} parent=31 // pred_check_branch
        %384 = sbr.rel (%p382) target = $region36
      $region35: #{cnn_policy_forward.4} parent=31 // pred_region
        _
      $region36: #{cnn_policy_forward.4} parent=31 // pred_fallthru
        _
    $region32: #{cnn_policy_forward.4} parent=5 // pred_fallthru
      _
    %p385 = scmp.le.s32.totalorder 2, %s9
    // Predicated region
    $region37: #{cnn_policy_forward.4} parent=5 // pred_check
      %p386 = pneg %p385
    $region38: #{cnn_policy_forward.4} parent=5 // pred_check_branch
      %388 = sbr.rel (%p386) target = $region40
    $region39: #{cnn_policy_forward.4} parent=5 // pred_region
      %s389 = ssub.s32 %s9, 2
      // Predicated region
      $region41: #{cnn_policy_forward.4} parent=39 // pred_check
        %p390 = pneg %p106
      $region42: #{cnn_policy_forward.4} parent=39 // pred_check_branch
        %392 = sbr.rel (%p390) target = $region44
      $region43: #{cnn_policy_forward.4} parent=39 // pred_region
        %p393 = scmp.lt.s32.totalorder %s15, 1
        %s394 = scalar_select %p393, %s15, 1
        %s395 = smul.addr %s394, 2
        %s396 = smul.addr %s395, 4
        %s397 = scalar_lea.vmem %s3, %s396
      $region44: #{cnn_policy_forward.4} parent=39 // pred_fallthru
        _
    $region40: #{cnn_policy_forward.4} parent=5 // pred_fallthru
      _
  $region6: #{cnn_policy_forward.4} parent=0 // loop_footer
    %s13 = sadd.s32 1, %s9
  $region7: #{cnn_policy_forward.4} parent=0 // loop_footer_branch
    %8 = sbr.rel target = $region3
  $region8: #{cnn_policy_forward.4} parent=0 // loop_exit
    _

// kernel: cnn_policy_forward.5
$region0: #{cnn_policy_forward.5}
  #allocation0 [shape = 'u32[]', space=smem, size = 0x4, offset = 0x4, fixed_abs, tag = 'smem constant byte address 0x4 - core index']
  #allocation1 [shape = 'u32[72,128]{1,0:T(1,128)}', space=vmem, size = 0x9000, scoped, tag = 'internal scratch']
  %s0 = inlined_call_operand.vmem [shape: bf16[8,144], index: 0, kind: input, shape index: {}]
  %s1 = inlined_call_operand.vmem [shape: bf16[144,32], index: 1, kind: input, shape index: {}]
  %s2 = inlined_call_operand.vmem [shape: f32[1,32], index: 2, kind: input, shape index: {}]
  %s3 = inlined_call_operand.vmem [shape: bf16[32,32], index: 3, kind: input, shape index: {}]
  %s4 = inlined_call_operand.vmem [shape: f32[1,32], index: 4, kind: input, shape index: {}]
  %s5 = inlined_call_operand.vmem [shape: bf16[32,3], index: 5, kind: input, shape index: {}]
  %s6 = inlined_call_operand.vmem [shape: f32[1,3], index: 6, kind: input, shape index: {}]
  %s7 = inlined_call_operand.vmem [shape: f32[8,3], index: 7, kind: output, shape index: {}]
  %s8 = sld [smem:[#allocation0]]
  $region38: #{cnn_policy_forward.5} parent=0
    _
  %s10 = ssub.s32 1, %s8
  %s11 = scalar_select 0, %s10, %s8
  // Predicated region
  $region2: #{cnn_policy_forward.5} parent=0 // pred_check
    _
  $region3: #{cnn_policy_forward.5} parent=0 // pred_check_branch
    %13 = sbr.rel (0) target = $region5
  $region4: #{cnn_policy_forward.5} parent=0 // pred_region
    _
  $region5: #{cnn_policy_forward.5} parent=0 // pred_fallthru
    _
  // Predicated region
  $region6: #{cnn_policy_forward.5} parent=0 // pred_check
    _
  $region7: #{cnn_policy_forward.5} parent=0 // pred_check_branch
    %15 = sbr.rel (0) target = $region9
  $region8: #{cnn_policy_forward.5} parent=0 // pred_region
    _
  $region9: #{cnn_policy_forward.5} parent=0 // pred_fallthru
    _
  // Predicated region
  $region10: #{cnn_policy_forward.5} parent=0 // pred_check
    _
  $region11: #{cnn_policy_forward.5} parent=0 // pred_check_branch
    %17 = sbr.rel (0) target = $region13
  $region12: #{cnn_policy_forward.5} parent=0 // pred_region
    _
  $region13: #{cnn_policy_forward.5} parent=0 // pred_fallthru
    _
  // Predicated region
  $region14: #{cnn_policy_forward.5} parent=0 // pred_check
    _
  $region15: #{cnn_policy_forward.5} parent=0 // pred_check_branch
    %19 = sbr.rel (0) target = $region17
  $region16: #{cnn_policy_forward.5} parent=0 // pred_region
    _
  $region17: #{cnn_policy_forward.5} parent=0 // pred_fallthru
    _
  // Predicated region
  $region18: #{cnn_policy_forward.5} parent=0 // pred_check
    _
  $region19: #{cnn_policy_forward.5} parent=0 // pred_check_branch
    %21 = sbr.rel (0) target = $region21
  $region20: #{cnn_policy_forward.5} parent=0 // pred_region
    _
  $region21: #{cnn_policy_forward.5} parent=0 // pred_fallthru
    _
  // Predicated region
  $region22: #{cnn_policy_forward.5} parent=0 // pred_check
    _
  $region23: #{cnn_policy_forward.5} parent=0 // pred_check_branch
    %23 = sbr.rel (0) target = $region25
  $region24: #{cnn_policy_forward.5} parent=0 // pred_region
    _
  $region25: #{cnn_policy_forward.5} parent=0 // pred_fallthru
    _
  // Predicated region
  $region26: #{cnn_policy_forward.5} parent=0 // pred_check
    _
  $region27: #{cnn_policy_forward.5} parent=0 // pred_check_branch
    %25 = sbr.rel (0) target = $region29
  $region28: #{cnn_policy_forward.5} parent=0 // pred_region
    _
  $region29: #{cnn_policy_forward.5} parent=0 // pred_fallthru
    _
  %v27 = vld [vmem:[%s0] sm:$0xff]
  %v28 = vld [vmem:[%s1] sm:$0xf]
  %v29 = vld [vmem:[%s1 + $0x4] sm:$0xf]
  %v30 = vld [vmem:[%s1 + $0x8] sm:$0xf]
  %v31 = vld [vmem:[%s1 + $0xc] sm:$0xf]
  %v32 = vld [vmem:[%s1 + $0x10] sm:$0xf]
  %v33 = vld [vmem:[%s1 + $0x14] sm:$0xf]
  %v34 = vld [vmem:[%s1 + $0x18] sm:$0xf]
  %v35 = vld [vmem:[%s1 + $0x1c] sm:$0xf]
  %v36 = vld [vmem:[%s1 + $0x20] sm:$0xf]
  %v37 = vld [vmem:[%s1 + $0x24] sm:$0xf]
  %v38 = vld [vmem:[%s1 + $0x28] sm:$0xf]
  %v39 = vld [vmem:[%s1 + $0x2c] sm:$0xf]
  %v40 = vld [vmem:[%s1 + $0x30] sm:$0xf]
  %v41 = vld [vmem:[%s1 + $0x34] sm:$0xf]
  %v42 = vld [vmem:[%s1 + $0x38] sm:$0xf]
  %v43 = vld [vmem:[%s1 + $0x3c] sm:$0xf]
  %v44 = vld [vmem:[%s1 + $0x40] sm:$0xf]
  %v45 = vld [vmem:[%s1 + $0x44] sm:$0xf]
  %v46 = vld [vmem:[%s2] sm:$0x1]
  %v48 = vperm.slane %v46, 0
  %v51 = vunpack.c.l.b16 %v27
  %v52 = vunpack.c.h.b16 %v27
  %v53 = vpack.c.b16 %v51, %v51
  %v54 = vpack.c.b16 %v52, %v52
  %v74 = vunpack.c.l.b16 %v28
  %v75 = vunpack.c.l.b16 %v29
  %v76 = vunpack.c.l.b16 %v30
  %v77 = vunpack.c.l.b16 %v31
  %v78 = vunpack.c.l.b16 %v32
  %v79 = vunpack.c.l.b16 %v33
  %v80 = vunpack.c.l.b16 %v34
  %v81 = vunpack.c.l.b16 %v35
  %v82 = vunpack.c.l.b16 %v36
  %v83 = vunpack.c.l.b16 %v37
  %v84 = vunpack.c.l.b16 %v38
  %v85 = vunpack.c.l.b16 %v39
  %v86 = vunpack.c.l.b16 %v40
  %v87 = vunpack.c.l.b16 %v41
  %v88 = vunpack.c.l.b16 %v42
  %v89 = vunpack.c.l.b16 %v43
  %v90 = vunpack.c.l.b16 %v44
  %v91 = vunpack.c.l.b16 %v45
  %v92 = vpack.c.b16 %v75, %v74
  %v93 = vpack.c.b16 %v77, %v76
  %v94 = vpack.c.b16 %v79, %v78
  %v95 = vpack.c.b16 %v81, %v80
  %v96 = vpack.c.b16 %v83, %v82
  %v97 = vpack.c.b16 %v85, %v84
  %v98 = vpack.c.b16 %v87, %v86
  %v99 = vpack.c.b16 %v89, %v88
  %v100 = vpack.c.b16 %v91, %v90
  %vm110 = vcmask 130048
  %v112 = vsel %vm110, %v54, 0
  %114 = vmatpush.bf16.msra.mxu0 %v99
  %115 = vmatpush.bf16.msra.mxu0 %v98
  %116 = vmatpush.bf16.msra.mxu0 %v97
  %117 = vmatpush.bf16.msra.mxu0 %v96
  %118 = vmatpush.bf16.msra.mxu0 %v95
  %119 = vmatpush.bf16.msra.mxu0 %v94
  %120 = vmatpush.bf16.msra.mxu0 %v93
  %121 = vmatpush.bf16.msra.mxu0 %v92
  %122 = vmatmul.bf16.gmra.mxu0 %v53
  %v123 = vpop.f32.mrf.mxu0
  %v124 = vadd.f32 %v48, %v123
  %v125 = vpop.f32.mrf.mxu0
  %126 = vdwg.mxu0
  %127 = vmatpush.bf16.msra.mxu0 0
  %128 = vmatpush.bf16.msra.mxu0 0
  %129 = vmatpush.bf16.msra.mxu0 0
  %130 = vmatpush.bf16.msra.mxu0 0
  %131 = vmatpush.bf16.msra.mxu0 0
  %132 = vmatpush.bf16.msra.mxu0 0
  %133 = vmatpush.bf16.msra.mxu0 0
  %134 = vmatpush.bf16.msra.mxu0 %v100
  %135 = vmatmul.bf16.gmra.mxu0 %v112
  %v136 = vpop.f32.mrf.mxu0
  %v137 = vadd.f32 %v124, %v136
  %v138 = vpop.f32.mrf.mxu0
  %139 = vdwg.mxu0
  %v140 = vtanh.pop %v137
  %v141 = vld [vmem:[%s3] sm:$0xf]
  %v142 = vld [vmem:[%s3 + $0x4] sm:$0xf]
  %v143 = vld [vmem:[%s3 + $0x8] sm:$0xf]
  %v144 = vld [vmem:[%s3 + $0xc] sm:$0xf]
  %v145 = vld [vmem:[%s4] sm:$0x1]
  %v146 = vpack.c.bf16 %v140, %v140
  %v148 = vperm.slane %v145, 0
  %v154 = vunpack.c.l.b16 %v141
  %v155 = vunpack.c.l.b16 %v142
  %v156 = vunpack.c.l.b16 %v143
  %v157 = vunpack.c.l.b16 %v144
  %v158 = vpack.c.b16 %v155, %v154
  %v159 = vpack.c.b16 %v157, %v156
  %vm162 = vcmask 261120
  %v164 = vsel %vm162, %v146, 0
  %166 = vmatpush.bf16.msra.mxu0 0
  %167 = vmatpush.bf16.msra.mxu0 0
  %168 = vmatpush.bf16.msra.mxu0 0
  %169 = vmatpush.bf16.msra.mxu0 0
  %170 = vmatpush.bf16.msra.mxu0 0
  %171 = vmatpush.bf16.msra.mxu0 0
  %172 = vmatpush.bf16.msra.mxu0 %v159
  %173 = vmatpush.bf16.msra.mxu0 %v158
  %174 = vmatmul.bf16.gmra.mxu0 %v164
  %v175 = vpop.f32.mrf.mxu0
  %v176 = vadd.f32 %v148, %v175
  %v177 = vpop.f32.mrf.mxu0
  %178 = vdwg.mxu0
  %v179 = vtanh.pop %v176
  %v180 = vld [vmem:[%s5] sm:$0xf]
  %v181 = vld [vmem:[%s5 + $0x4] sm:$0xf]
  %v182 = vld [vmem:[%s5 + $0x8] sm:$0xf]
  %v183 = vld [vmem:[%s5 + $0xc] sm:$0xf]
  %v184 = vld [vmem:[%s6] sm:$0x1]
  %v185 = vpack.c.bf16 %v179, %v179
  %v187 = vperm.slane %v184, 0
  %v193 = vunpack.c.l.b16 %v180
  %v194 = vunpack.c.l.b16 %v181
  %v195 = vunpack.c.l.b16 %v182
  %v196 = vunpack.c.l.b16 %v183
  %v197 = vpack.c.b16 %v194, %v193
  %v198 = vpack.c.b16 %v196, %v195
  %v202 = vsel %vm162, %v185, 0
  %204 = vmatpush.bf16.msra.mxu0 0
  %205 = vmatpush.bf16.msra.mxu0 0
  %206 = vmatpush.bf16.msra.mxu0 0
  %207 = vmatpush.bf16.msra.mxu0 0
  %208 = vmatpush.bf16.msra.mxu0 0
  %209 = vmatpush.bf16.msra.mxu0 0
  %210 = vmatpush.bf16.msra.mxu0 %v198
  %211 = vmatpush.bf16.msra.mxu0 %v197
  %212 = vmatmul.bf16.gmra.mxu0 %v202
  %v213 = vpop.f32.mrf.mxu0
  %v214 = vadd.f32 %v187, %v213
  %v215 = vpop.f32.mrf.mxu0
  %216 = vdwg.mxu0
  %vm217 = vcmask 23552
  %218 = vst.msk [vmem:[%s7] sm:$0xff] %vm217, %v214
  // Predicated region
  $region30: #{cnn_policy_forward.5} parent=0 // pred_check
    _
  $region31: #{cnn_policy_forward.5} parent=0 // pred_check_branch
    %220 = sbr.rel (0) target = $region33
  $region32: #{cnn_policy_forward.5} parent=0 // pred_region
    _
  $region33: #{cnn_policy_forward.5} parent=0 // pred_fallthru
    _
  // Predicated region
  $region34: #{cnn_policy_forward.5} parent=0 // pred_check
    _
  $region35: #{cnn_policy_forward.5} parent=0 // pred_check_branch
    %222 = sbr.rel (0) target = $region37
  $region36: #{cnn_policy_forward.5} parent=0 // pred_region
    _
  $region37: #{cnn_policy_forward.5} parent=0 // pred_fallthru
    _

</llo_original>
